<compile_context>
chip_gen: v5e
topology: v5e:2x2
jax: 0.10.0
libtpu: 0.0.40
codegen_flags: <defaults>
</compile_context>

<pallas_src>
import functools

import jax
import jax.numpy as jnp
import numpy as np
from jax.experimental import pallas as pl
from jax.experimental.pallas import tpu as pltpu

LANE = 128       # lane granularity for feature / node dims
EDGE_PAD = 32    # sublane-granularity pad for the edge axis (mult. of 8 f32 / 16 bf16)


def _round_up(x, m):
    return (x + m - 1) // m * m


def _pad2(a, rows, cols):
    return jnp.pad(a, ((0, rows - a.shape[0]), (0, cols - a.shape[1])))


def formula_net_kernel(
    nodes_ref, ea_ref, g_src_ref, g_dst_ref, g_srcT_ref, g_dstT_ref,
    inv_src_ref, inv_dst_ref,
    w1_ref, we_ref, b1_ref, p_w2_ref, p_b2_ref, c_w2_ref, c_b2_ref,
    f_w_ref, f_b_ref,
    out_ref, *, num_iterations):
    f32, bf16 = jnp.float32, jnp.bfloat16

    nodes0 = nodes_ref[...]                       # [Np, Dp] f32 (carry stays f32)
    Np, Dp = nodes0.shape

    # bf16 one-hots (exact 0/1), both orientations shipped from the host so
    # gather AND scatter are plain [M,K]@[K,N] dots with no in-kernel transpose.
    g_src = g_src_ref[...]                        # [Ep, Np] one-hot of edge_index[0]
    g_dst = g_dst_ref[...]                        # [Ep, Np] one-hot of edge_index[1]
    g_srcT = g_srcT_ref[...]                      # [Np, Ep]
    g_dstT = g_dstT_ref[...]                      # [Np, Ep]

    # Hoisted parameter loads (BN + bias already folded, weights bf16).
    w1 = w1_ref[...]                              # [2Dp, 2Dp] fused parent|child layer-1
    p_w2 = p_w2_ref[...]; c_w2 = c_w2_ref[...]; f_w = f_w_ref[...]       # bf16
    p_b2 = p_b2_ref[...]; c_b2 = c_b2_ref[...]; f_b = f_b_ref[...]       # [1, Dp]  f32
    inv_src = inv_src_ref[...]; inv_dst = inv_dst_ref[...]               # [Np, 1] f32

    # Iteration-invariant edge_attr contribution (+ folded layer-1 biases) for
    # both branches at once; computed once, outside the message-passing loop.
    l1_const = (jnp.dot(ea_ref[...], we_ref[...], preferred_element_type=f32)
                + b1_ref[...])                    # [Ep, 2Dp]

    def body(_, nodes):
        nodes_bf = nodes.astype(bf16)
        # Gather node states onto edges (one-hot matmul == x[edge_index[k]]).
        x_src = jnp.dot(g_src, nodes_bf, preferred_element_type=f32)     # [Ep, Dp]
        x_dst = jnp.dot(g_dst, nodes_bf, preferred_element_type=f32)     # [Ep, Dp]
        cat = jnp.concatenate([x_dst, x_src], axis=-1).astype(bf16)      # [Ep, 2Dp]

        # Fused layer-1 for both branches (K = N = 2*Dp fills the 256-wide MXU).
        h = jnp.maximum(jnp.dot(cat, w1, preferred_element_type=f32) + l1_const, 0.0)
        h_p = h[:, :Dp].astype(bf16)              # parent half (lane-aligned slice)
        h_c = h[:, Dp:].astype(bf16)              # child  half

        msg_p = jnp.maximum(
            jnp.dot(h_p, p_w2, preferred_element_type=f32) + p_b2, 0.0).astype(bf16)
        msg_c = jnp.maximum(
            jnp.dot(h_c, c_w2, preferred_element_type=f32) + c_b2, 0.0).astype(bf16)

        # Scatter-sum at the aggregation node + degree^-1 column broadcast.
        fi = inv_dst * jnp.dot(g_dstT, msg_p, preferred_element_type=f32)  # [Np, Dp]
        fo = inv_src * jnp.dot(g_srcT, msg_c, preferred_element_type=f32)  # [Np, Dp]

        # CombinedAggregation (Linear + folded BN + ReLU) and residual update.
        z = nodes + fi + fo
        u = jnp.maximum(
            jnp.dot(z.astype(bf16), f_w, preferred_element_type=f32) + f_b, 0.0)
        return nodes + u

    out_ref[...] = jax.lax.fori_loop(0, num_iterations, body, nodes0)


def _fold_edge_mlp(p, Dp, EDp, first_block):
    """Fold eval-mode BN into the Linear weights and pad to lane multiples."""
    s1, t1 = p["bn1_s"], p["bn1_b"]
    s2, t2 = p["bn2_s"], p["bn2_b"]
    w_i = _pad2(p["w1_xi"] * s1, Dp, Dp)
    w_j = _pad2(p["w1_xj"] * s1, Dp, Dp)
    w_e = _pad2(p["w1_e"] * s1, EDp, Dp)
    b1 = _pad2(p["b1"] * s1 + t1, 1, Dp)
    w2 = _pad2(p["w2"] * s2, Dp, Dp)
    b2 = _pad2(p["b2"] * s2 + t2, 1, Dp)
    # In-kernel `cat` is [x_dst, x_src]; order the stacked weight rows accordingly.
    blocks = [w_i, w_j] if first_block == "i" else [w_j, w_i]
    w1 = jnp.concatenate(blocks, axis=0)          # [2*Dp, Dp]
    return w1, w_e, b1, w2, b2


@functools.partial(jax.jit, static_argnames=("num_iterations",))
def formula_net_sat(nodes, edge_index, edge_attr, params, num_iterations):
    N, D = nodes.shape
    E, ED = edge_attr.shape
    Np, Dp, EDp = _round_up(N, LANE), _round_up(D, LANE), _round_up(ED, LANE)
    # Edge axis only appears as a sublane / contraction dim -> sublane padding.
    Ep = _round_up(E, EDGE_PAD)

    src, dst = edge_index[0], edge_index[1]
    # Padded edge slots get index -1 -> all-zero one-hot rows (inert edges).
    pad_idx = -jnp.ones((Ep - E,), src.dtype)
    src_p = jnp.concatenate([src, pad_idx])
    dst_p = jnp.concatenate([dst, pad_idx])
    g_src = jax.nn.one_hot(src_p, Np, dtype=jnp.bfloat16)   # [Ep, Np]
    g_dst = jax.nn.one_hot(dst_p, Np, dtype=jnp.bfloat16)   # [Ep, Np]
    g_srcT = g_src.T                                         # [Np, Ep]  (host transpose)
    g_dstT = g_dst.T                                         # [Np, Ep]

    # degree(edge_index[k], N) and its safe inverse (inf -> 0), on the host.
    ones = jnp.ones((E,), jnp.float32)
    deg_dst = jax.ops.segment_sum(ones, dst, N)
    deg_src = jax.ops.segment_sum(ones, src, N)
    inv_dst = jnp.where(deg_dst > 0, 1.0 / jnp.maximum(deg_dst, 1.0), 0.0)
    inv_src = jnp.where(deg_src > 0, 1.0 / jnp.maximum(deg_src, 1.0), 0.0)
    inv_dst = _pad2(inv_dst[:, None], Np, 1)                 # [Np, 1] (not broadcast-materialized)
    inv_src = _pad2(inv_src[:, None], Np, 1)

    nodes_p = _pad2(nodes.astype(jnp.float32), Np, Dp)
    ea_p = _pad2(edge_attr, Ep, EDp).astype(jnp.bfloat16)

    p_w1, p_we, p_b1, p_w2, p_b2 = _fold_edge_mlp(params["parent"], Dp, EDp, "i")
    c_w1, c_we, c_b1, c_w2, c_b2 = _fold_edge_mlp(params["child"], Dp, EDp, "j")
    # Fused parent|child layer-1 weight / edge-attr weight / bias (bf16 weights).
    w1_both = jnp.concatenate([p_w1, c_w1], axis=1).astype(jnp.bfloat16)   # [2Dp, 2Dp]
    we_both = jnp.concatenate([p_we, c_we], axis=1).astype(jnp.bfloat16)   # [EDp, 2Dp]
    b1_both = jnp.concatenate([p_b1, c_b1], axis=1)                        # [1, 2Dp] f32
    f = params["final"]
    f_w = _pad2(f["w"] * f["bn_s"], Dp, Dp).astype(jnp.bfloat16)
    f_b = _pad2(f["b"] * f["bn_s"] + f["bn_b"], 1, Dp)

    inputs = [nodes_p, ea_p, g_src, g_dst, g_srcT, g_dstT, inv_src, inv_dst,
              w1_both, we_both, b1_both,
              p_w2.astype(jnp.bfloat16), p_b2,
              c_w2.astype(jnp.bfloat16), c_b2,
              f_w, f_b]

    # Everything stays VMEM-resident (grid-less kernel): size the scoped VMEM
    # limit explicitly instead of relying on the default (16 MiB v5e / 32 MiB
    # v6e,v7x), with headroom and a cap below v7x's 64 MiB physical.
    resident = sum(int(np.prod(x.shape)) * x.dtype.itemsize for x in inputs)
    resident += Np * Dp * 4                    # output buffer
    resident += 3 * Ep * 2 * Dp * 4            # in-loop activations (l1_const/cat/h)
    vmem_limit = int(min(max(2 * resident + (4 << 20), 32 << 20), 48 << 20))

    kernel = functools.partial(formula_net_kernel, num_iterations=num_iterations)
    out_p = pl.pallas_call(
        kernel,
        out_shape=jax.ShapeDtypeStruct((Np, Dp), jnp.float32),
        in_specs=[pl.BlockSpec(memory_space=pltpu.MemorySpace.VMEM)] * len(inputs),
        out_specs=pl.BlockSpec(memory_space=pltpu.MemorySpace.VMEM),
        input_output_aliases={0: 0},          # update node state in place
        compiler_params=pltpu.CompilerParams(vmem_limit_bytes=vmem_limit),
    )(*inputs)
    return out_p[:N, :D]


def init_params(key, D, ED):
    eps = 1e-5
    ks = iter(jax.random.split(key, 64))

    def linear(fan_in, fan_out):
        # PyTorch Linear applied as x @ W_T + b; we build W_T directly [in, out].
        w = jax.random.normal(next(ks), (fan_in, fan_out), jnp.float32) / np.sqrt(fan_in)
        b = 0.1 * jax.random.normal(next(ks), (1, fan_out), jnp.float32)
        return w, b

    def bn(dim):
        gamma = 1.0 + 0.1 * jax.random.normal(next(ks), (1, dim), jnp.float32)
        beta = 0.1 * jax.random.normal(next(ks), (1, dim), jnp.float32)
        mean = 0.1 * jax.random.normal(next(ks), (1, dim), jnp.float32)
        var = 1.0 + 0.05 * jnp.abs(jax.random.normal(next(ks), (1, dim), jnp.float32))
        scale = gamma / jnp.sqrt(var + eps)
        shift = beta - mean * scale
        return scale, shift

    def edge_mlp_params():
        w1, b1 = linear(2 * D + ED, D)
        bn1_s, bn1_b = bn(D)
        w2, b2 = linear(D, D)
        bn2_s, bn2_b = bn(D)
        return {
            "w1_xi": w1[:D], "w1_xj": w1[D:2 * D], "w1_e": w1[2 * D:],
            "b1": b1, "bn1_s": bn1_s, "bn1_b": bn1_b,
            "w2": w2, "b2": b2, "bn2_s": bn2_s, "bn2_b": bn2_b,
        }

    parent = edge_mlp_params()
    child = edge_mlp_params()
    wf, bf = linear(D, D)
    bnf_s, bnf_b = bn(D)
    return {
        "parent": parent,
        "child": child,
        "final": {"w": wf, "b": bf, "bn_s": bnf_s, "bn_b": bnf_b},
    }


def reference(nodes, edge_index, edge_attr, params, num_iterations):
    # Pure-JAX f32 reference (segment_sum based, unfolded params).
    N = nodes.shape[0]
    src, dst = edge_index[0], edge_index[1]

    def edge_mlp(xi, xj, ea, p):
        h = xi @ p["w1_xi"] + xj @ p["w1_xj"] + ea @ p["w1_e"] + p["b1"]
        h = jnp.maximum(h * p["bn1_s"] + p["bn1_b"], 0.0)
        h = h @ p["w2"] + p["b2"]
        h = jnp.maximum(h * p["bn2_s"] + p["bn2_b"], 0.0)
        return h

    ones = jnp.ones((edge_index.shape[1],), nodes.dtype)
    deg_dst = jax.ops.segment_sum(ones, dst, N)
    deg_src = jax.ops.segment_sum(ones, src, N)
    inv_dst = jnp.where(deg_dst > 0, 1.0 / jnp.maximum(deg_dst, 1.0), 0.0)[:, None]
    inv_src = jnp.where(deg_src > 0, 1.0 / jnp.maximum(deg_src, 1.0), 0.0)[:, None]
    p, c, f = params["parent"], params["child"], params["final"]
    for _ in range(num_iterations):
        xs, xd = nodes[src], nodes[dst]
        fi = inv_dst * jax.ops.segment_sum(edge_mlp(xd, xs, edge_attr, p), dst, N)
        fo = inv_src * jax.ops.segment_sum(edge_mlp(xs, xd, edge_attr, c), src, N)
        z = nodes + fi + fo
        u = jnp.maximum((z @ f["w"] + f["b"]) * f["bn_s"] + f["bn_b"], 0.0)
        nodes = nodes + u
    return nodes


if __name__ == "__main__":
    key = jax.random.PRNGKey(0)
    N, E, D, ED = 16, 32, 32, 32           # nodes, edges, embedding_dim, edge_dim
    num_iterations = 2

    k_nodes, k_src, k_dst, k_ea, k_par = jax.random.split(key, 5)
    nodes = jax.random.normal(k_nodes, (N, D), jnp.float32)
    src = jax.random.randint(k_src, (E,), 0, N)
    dst = jax.random.randint(k_dst, (E,), 0, N)
    edge_index = jnp.stack([src, dst])          # [2, E]
    edge_attr = jax.random.normal(k_ea, (E, ED), jnp.float32)
    params = init_params(k_par, D, ED)

    out = formula_net_sat(nodes, edge_index, edge_attr, params, num_iterations)
    out = jax.block_until_ready(out)

    ref = reference(nodes, edge_index, edge_attr, params, num_iterations)
    assert out.shape == (N, D)
    # Kernel runs all MXU contractions with bf16 operands (f32 accumulation),
    # so tolerance vs. the f32 reference is loosened accordingly.
    np.testing.assert_allclose(np.asarray(out), np.asarray(ref), rtol=5e-2, atol=5e-2)
    print("KERNEL_OK")
</pallas_src>

<mosaic_0001>
module attributes {stable_mosaic.version = 11 : i64} {
  func.func @formula_net_kernel(%arg0: memref<128x128xf32, #tpu.memory_space<vmem>>, %arg1: memref<32x128xbf16, #tpu.memory_space<vmem>>, %arg2: memref<32x128xbf16, #tpu.memory_space<vmem>>, %arg3: memref<32x128xbf16, #tpu.memory_space<vmem>>, %arg4: memref<128x32xbf16, #tpu.memory_space<vmem>>, %arg5: memref<128x32xbf16, #tpu.memory_space<vmem>>, %arg6: memref<128x1xf32, #tpu.memory_space<vmem>>, %arg7: memref<128x1xf32, #tpu.memory_space<vmem>>, %arg8: memref<256x256xbf16, #tpu.memory_space<vmem>>, %arg9: memref<128x256xbf16, #tpu.memory_space<vmem>>, %arg10: memref<1x256xf32, #tpu.memory_space<vmem>>, %arg11: memref<128x128xbf16, #tpu.memory_space<vmem>>, %arg12: memref<1x128xf32, #tpu.memory_space<vmem>>, %arg13: memref<128x128xbf16, #tpu.memory_space<vmem>>, %arg14: memref<1x128xf32, #tpu.memory_space<vmem>>, %arg15: memref<128x128xbf16, #tpu.memory_space<vmem>>, %arg16: memref<1x128xf32, #tpu.memory_space<vmem>>, %arg17: memref<128x128xf32, #tpu.memory_space<vmem>>) attributes {dimension_semantics = [], scalar_prefetch = 0 : i64, scratch_operands = 0 : i64, tpu.core_type = #tpu.core_type<tc>} {
    %c0 = arith.constant 0 : index
    %c0_0 = arith.constant 0 : index
    %0 = vector.load %arg0[%c0, %c0_0] : memref<128x128xf32, #tpu.memory_space<vmem>>, vector<128x128xf32>
    %c0_1 = arith.constant 0 : index
    %c0_2 = arith.constant 0 : index
    %1 = vector.load %arg2[%c0_1, %c0_2] : memref<32x128xbf16, #tpu.memory_space<vmem>>, vector<32x128xbf16>
    %c0_3 = arith.constant 0 : index
    %c0_4 = arith.constant 0 : index
    %2 = vector.load %arg3[%c0_3, %c0_4] : memref<32x128xbf16, #tpu.memory_space<vmem>>, vector<32x128xbf16>
    %c0_5 = arith.constant 0 : index
    %c0_6 = arith.constant 0 : index
    %3 = vector.load %arg4[%c0_5, %c0_6] : memref<128x32xbf16, #tpu.memory_space<vmem>>, vector<128x32xbf16>
    %c0_7 = arith.constant 0 : index
    %c0_8 = arith.constant 0 : index
    %4 = vector.load %arg5[%c0_7, %c0_8] : memref<128x32xbf16, #tpu.memory_space<vmem>>, vector<128x32xbf16>
    %c0_9 = arith.constant 0 : index
    %c0_10 = arith.constant 0 : index
    %5 = vector.load %arg8[%c0_9, %c0_10] : memref<256x256xbf16, #tpu.memory_space<vmem>>, vector<256x256xbf16>
    %c0_11 = arith.constant 0 : index
    %c0_12 = arith.constant 0 : index
    %6 = vector.load %arg11[%c0_11, %c0_12] : memref<128x128xbf16, #tpu.memory_space<vmem>>, vector<128x128xbf16>
    %c0_13 = arith.constant 0 : index
    %c0_14 = arith.constant 0 : index
    %7 = vector.load %arg13[%c0_13, %c0_14] : memref<128x128xbf16, #tpu.memory_space<vmem>>, vector<128x128xbf16>
    %c0_15 = arith.constant 0 : index
    %c0_16 = arith.constant 0 : index
    %8 = vector.load %arg15[%c0_15, %c0_16] : memref<128x128xbf16, #tpu.memory_space<vmem>>, vector<128x128xbf16>
    %c0_17 = arith.constant 0 : index
    %c0_18 = arith.constant 0 : index
    %9 = vector.load %arg12[%c0_17, %c0_18] : memref<1x128xf32, #tpu.memory_space<vmem>>, vector<1x128xf32>
    %c0_19 = arith.constant 0 : index
    %c0_20 = arith.constant 0 : index
    %10 = vector.load %arg14[%c0_19, %c0_20] : memref<1x128xf32, #tpu.memory_space<vmem>>, vector<1x128xf32>
    %c0_21 = arith.constant 0 : index
    %c0_22 = arith.constant 0 : index
    %11 = vector.load %arg16[%c0_21, %c0_22] : memref<1x128xf32, #tpu.memory_space<vmem>>, vector<1x128xf32>
    %c0_23 = arith.constant 0 : index
    %c0_24 = arith.constant 0 : index
    %12 = vector.load %arg6[%c0_23, %c0_24] : memref<128x1xf32, #tpu.memory_space<vmem>>, vector<128x1xf32>
    %c0_25 = arith.constant 0 : index
    %c0_26 = arith.constant 0 : index
    %13 = vector.load %arg7[%c0_25, %c0_26] : memref<128x1xf32, #tpu.memory_space<vmem>>, vector<128x1xf32>
    %c0_27 = arith.constant 0 : index
    %c0_28 = arith.constant 0 : index
    %14 = vector.load %arg1[%c0_27, %c0_28] : memref<32x128xbf16, #tpu.memory_space<vmem>>, vector<32x128xbf16>
    %c0_29 = arith.constant 0 : index
    %c0_30 = arith.constant 0 : index
    %15 = vector.load %arg9[%c0_29, %c0_30] : memref<128x256xbf16, #tpu.memory_space<vmem>>, vector<128x256xbf16>
    %cst = arith.constant dense<0.000000e+00> : vector<32x256xf32>
    %16 = tpu.matmul %14, %15, %cst {dimension_numbers = #tpu.dot_dimension_numbers<[1], [0], [0], [1], [0, 0, 1, 1], [], []>} : vector<32x128xbf16>, vector<128x256xbf16>, vector<32x256xf32> -> vector<32x256xf32>
    %c0_31 = arith.constant 0 : index
    %c0_32 = arith.constant 0 : index
    %17 = vector.load %arg10[%c0_31, %c0_32] : memref<1x256xf32, #tpu.memory_space<vmem>>, vector<1x256xf32>
    %18 = vector.broadcast %17 : vector<1x256xf32> to vector<32x256xf32>
    %19 = arith.addf %16, %18 : vector<32x256xf32>
    %c0_i32 = arith.constant 0 : i32
    %c2_i32 = arith.constant 2 : i32
    %20 = arith.addi %c0_i32, %c2_i32 : i32
    %c1_i32 = arith.constant 1 : i32
    %21 = scf.for %arg18 = %c0_i32 to %20 step %c1_i32 iter_args(%arg19 = %0) -> (vector<128x128xf32>)  : i32 {
      %23 = arith.truncf %arg19 : vector<128x128xf32> to vector<128x128xbf16>
      %cst_35 = arith.constant dense<0.000000e+00> : vector<32x128xf32>
      %24 = tpu.matmul %1, %23, %cst_35 {dimension_numbers = #tpu.dot_dimension_numbers<[1], [0], [0], [1], [0, 0, 1, 1], [], []>} : vector<32x128xbf16>, vector<128x128xbf16>, vector<32x128xf32> -> vector<32x128xf32>
      %cst_36 = arith.constant dense<0.000000e+00> : vector<32x128xf32>
      %25 = tpu.matmul %2, %23, %cst_36 {dimension_numbers = #tpu.dot_dimension_numbers<[1], [0], [0], [1], [0, 0, 1, 1], [], []>} : vector<32x128xbf16>, vector<128x128xbf16>, vector<32x128xf32> -> vector<32x128xf32>
      %26 = tpu.concatenate %25, %24 in 1 : vector<32x128xf32>, vector<32x128xf32> -> vector<32x256xf32>
      %27 = arith.truncf %26 : vector<32x256xf32> to vector<32x256xbf16>
      %cst_37 = arith.constant dense<0.000000e+00> : vector<32x256xf32>
      %28 = tpu.matmul %27, %5, %cst_37 {dimension_numbers = #tpu.dot_dimension_numbers<[1], [0], [0], [1], [0, 0, 1, 1], [], []>} : vector<32x256xbf16>, vector<256x256xbf16>, vector<32x256xf32> -> vector<32x256xf32>
      %29 = arith.addf %28, %19 : vector<32x256xf32>
      %cst_38 = arith.constant 0.000000e+00 : f32
      %30 = vector.broadcast %cst_38 : f32 to vector<32x256xf32>
      %31 = arith.maximumf %29, %30 : vector<32x256xf32>
      %32 = vector.extract_strided_slice %31 {offsets = [0, 0], sizes = [32, 128], strides = [1, 1]} : vector<32x256xf32> to vector<32x128xf32>
      %33 = arith.truncf %32 : vector<32x128xf32> to vector<32x128xbf16>
      %34 = vector.extract_strided_slice %31 {offsets = [0, 128], sizes = [32, 128], strides = [1, 1]} : vector<32x256xf32> to vector<32x128xf32>
      %35 = arith.truncf %34 : vector<32x128xf32> to vector<32x128xbf16>
      %cst_39 = arith.constant dense<0.000000e+00> : vector<32x128xf32>
      %36 = tpu.matmul %33, %6, %cst_39 {dimension_numbers = #tpu.dot_dimension_numbers<[1], [0], [0], [1], [0, 0, 1, 1], [], []>} : vector<32x128xbf16>, vector<128x128xbf16>, vector<32x128xf32> -> vector<32x128xf32>
      %37 = vector.broadcast %9 : vector<1x128xf32> to vector<32x128xf32>
      %38 = arith.addf %36, %37 : vector<32x128xf32>
      %cst_40 = arith.constant 0.000000e+00 : f32
      %39 = vector.broadcast %cst_40 : f32 to vector<32x128xf32>
      %40 = arith.maximumf %38, %39 : vector<32x128xf32>
      %41 = arith.truncf %40 : vector<32x128xf32> to vector<32x128xbf16>
      %cst_41 = arith.constant dense<0.000000e+00> : vector<32x128xf32>
      %42 = tpu.matmul %35, %7, %cst_41 {dimension_numbers = #tpu.dot_dimension_numbers<[1], [0], [0], [1], [0, 0, 1, 1], [], []>} : vector<32x128xbf16>, vector<128x128xbf16>, vector<32x128xf32> -> vector<32x128xf32>
      %43 = vector.broadcast %10 : vector<1x128xf32> to vector<32x128xf32>
      %44 = arith.addf %42, %43 : vector<32x128xf32>
      %cst_42 = arith.constant 0.000000e+00 : f32
      %45 = vector.broadcast %cst_42 : f32 to vector<32x128xf32>
      %46 = arith.maximumf %44, %45 : vector<32x128xf32>
      %47 = arith.truncf %46 : vector<32x128xf32> to vector<32x128xbf16>
      %cst_43 = arith.constant dense<0.000000e+00> : vector<128x128xf32>
      %48 = tpu.matmul %4, %41, %cst_43 {dimension_numbers = #tpu.dot_dimension_numbers<[1], [0], [0], [1], [0, 0, 1, 1], [], []>} : vector<128x32xbf16>, vector<32x128xbf16>, vector<128x128xf32> -> vector<128x128xf32>
      %49 = vector.broadcast %13 : vector<128x1xf32> to vector<128x128xf32>
      %50 = arith.mulf %49, %48 : vector<128x128xf32>
      %cst_44 = arith.constant dense<0.000000e+00> : vector<128x128xf32>
      %51 = tpu.matmul %3, %47, %cst_44 {dimension_numbers = #tpu.dot_dimension_numbers<[1], [0], [0], [1], [0, 0, 1, 1], [], []>} : vector<128x32xbf16>, vector<32x128xbf16>, vector<128x128xf32> -> vector<128x128xf32>
      %52 = vector.broadcast %12 : vector<128x1xf32> to vector<128x128xf32>
      %53 = arith.mulf %52, %51 : vector<128x128xf32>
      %54 = arith.addf %arg19, %50 : vector<128x128xf32>
      %55 = arith.addf %54, %53 : vector<128x128xf32>
      %56 = arith.truncf %55 : vector<128x128xf32> to vector<128x128xbf16>
      %cst_45 = arith.constant dense<0.000000e+00> : vector<128x128xf32>
      %57 = tpu.matmul %56, %8, %cst_45 {dimension_numbers = #tpu.dot_dimension_numbers<[1], [0], [0], [1], [0, 0, 1, 1], [], []>} : vector<128x128xbf16>, vector<128x128xbf16>, vector<128x128xf32> -> vector<128x128xf32>
      %58 = vector.broadcast %11 : vector<1x128xf32> to vector<128x128xf32>
      %59 = arith.addf %57, %58 : vector<128x128xf32>
      %cst_46 = arith.constant 0.000000e+00 : f32
      %60 = vector.broadcast %cst_46 : f32 to vector<128x128xf32>
      %61 = arith.maximumf %59, %60 : vector<128x128xf32>
      %62 = arith.addf %arg19, %61 : vector<128x128xf32>
      scf.yield %62 : vector<128x128xf32>
    }
    %c0_33 = arith.constant 0 : index
    %c0_34 = arith.constant 0 : index
    %22 = vector.load %arg17[%c0_33, %c0_34] : memref<128x128xf32, #tpu.memory_space<vmem>>, vector<128x128xf32>
    tpu.vector_store %arg17[%c0_33, %c0_34], %21 {strides = array<i32>} : memref<128x128xf32, #tpu.memory_space<vmem>>, vector<128x128xf32>,
    return
  }
}

</mosaic_0001>

<llo_original>
// kernel: formula_net_sat.1
$region0: #{formula_net_sat.1}
  #allocation0 [shape = 'u32[]', space=smem, size = 0x4, offset = 0x4, fixed_abs, tag = 'smem constant byte address 0x4 - core index']
  #allocation1 [shape = 'u32[72,128]{1,0:T(1,128)}', space=vmem, size = 0x9000, scoped, tag = 'internal scratch']
  %s0 = inlined_call_operand.vmem [shape: f32[128,128], index: 0, kind: input, shape index: {}, may-alias: {0,17}]
  %s1 = inlined_call_operand.vmem [shape: bf16[32,128], index: 1, kind: input, shape index: {}]
  %s2 = inlined_call_operand.vmem [shape: bf16[32,128], index: 2, kind: input, shape index: {}]
  %s3 = inlined_call_operand.vmem [shape: bf16[32,128], index: 3, kind: input, shape index: {}]
  %s4 = inlined_call_operand.vmem [shape: bf16[128,32], index: 4, kind: input, shape index: {}]
  %s5 = inlined_call_operand.vmem [shape: bf16[128,32], index: 5, kind: input, shape index: {}]
  %s6 = inlined_call_operand.vmem [shape: f32[128,1], index: 6, kind: input, shape index: {}]
  %s7 = inlined_call_operand.vmem [shape: f32[128,1], index: 7, kind: input, shape index: {}]
  %s8 = inlined_call_operand.vmem [shape: bf16[256,256], index: 8, kind: input, shape index: {}]
  %s9 = inlined_call_operand.vmem [shape: bf16[128,256], index: 9, kind: input, shape index: {}]
  %s10 = inlined_call_operand.vmem [shape: f32[1,256], index: 10, kind: input, shape index: {}]
  %s11 = inlined_call_operand.vmem [shape: bf16[128,128], index: 11, kind: input, shape index: {}]
  %s12 = inlined_call_operand.vmem [shape: f32[1,128], index: 12, kind: input, shape index: {}]
  %s13 = inlined_call_operand.vmem [shape: bf16[128,128], index: 13, kind: input, shape index: {}]
  %s14 = inlined_call_operand.vmem [shape: f32[1,128], index: 14, kind: input, shape index: {}]
  %s15 = inlined_call_operand.vmem [shape: bf16[128,128], index: 15, kind: input, shape index: {}]
  %s16 = inlined_call_operand.vmem [shape: f32[1,128], index: 16, kind: input, shape index: {}]
  %s17 = inlined_call_operand.vmem [shape: f32[128,128], index: 17, kind: output, shape index: {}, may-alias: {0,17}]
  %s18 = sld [smem:[#allocation0]]
  $region85: #{formula_net_sat.1} parent=0
    _
  %s20 = ssub.s32 1, %s18
  %s21 = scalar_select 0, %s20, %s18
  // Predicated region
  $region2: #{formula_net_sat.1} parent=0 // pred_check
    _
  $region3: #{formula_net_sat.1} parent=0 // pred_check_branch
    %23 = sbr.rel (0) target = $region5
  $region4: #{formula_net_sat.1} parent=0 // pred_region
    _
  $region5: #{formula_net_sat.1} parent=0 // pred_fallthru
    _
  // Predicated region
  $region6: #{formula_net_sat.1} parent=0 // pred_check
    _
  $region7: #{formula_net_sat.1} parent=0 // pred_check_branch
    %25 = sbr.rel (0) target = $region9
  $region8: #{formula_net_sat.1} parent=0 // pred_region
    _
  $region9: #{formula_net_sat.1} parent=0 // pred_fallthru
    _
  // Predicated region
  $region10: #{formula_net_sat.1} parent=0 // pred_check
    _
  $region11: #{formula_net_sat.1} parent=0 // pred_check_branch
    %27 = sbr.rel (0) target = $region13
  $region12: #{formula_net_sat.1} parent=0 // pred_region
    _
  $region13: #{formula_net_sat.1} parent=0 // pred_fallthru
    _
  // Predicated region
  $region14: #{formula_net_sat.1} parent=0 // pred_check
    _
  $region15: #{formula_net_sat.1} parent=0 // pred_check_branch
    %29 = sbr.rel (0) target = $region17
  $region16: #{formula_net_sat.1} parent=0 // pred_region
    _
  $region17: #{formula_net_sat.1} parent=0 // pred_fallthru
    _
  // Predicated region
  $region18: #{formula_net_sat.1} parent=0 // pred_check
    _
  $region19: #{formula_net_sat.1} parent=0 // pred_check_branch
    %31 = sbr.rel (0) target = $region21
  $region20: #{formula_net_sat.1} parent=0 // pred_region
    _
  $region21: #{formula_net_sat.1} parent=0 // pred_fallthru
    _
  // Predicated region
  $region22: #{formula_net_sat.1} parent=0 // pred_check
    _
  $region23: #{formula_net_sat.1} parent=0 // pred_check_branch
    %33 = sbr.rel (0) target = $region25
  $region24: #{formula_net_sat.1} parent=0 // pred_region
    _
  $region25: #{formula_net_sat.1} parent=0 // pred_fallthru
    _
  // Predicated region
  $region26: #{formula_net_sat.1} parent=0 // pred_check
    _
  $region27: #{formula_net_sat.1} parent=0 // pred_check_branch
    %35 = sbr.rel (0) target = $region29
  $region28: #{formula_net_sat.1} parent=0 // pred_region
    _
  $region29: #{formula_net_sat.1} parent=0 // pred_fallthru
    _
  // Predicated region
  $region30: #{formula_net_sat.1} parent=0 // pred_check
    _
  $region31: #{formula_net_sat.1} parent=0 // pred_check_branch
    %37 = sbr.rel (0) target = $region33
  $region32: #{formula_net_sat.1} parent=0 // pred_region
    _
  $region33: #{formula_net_sat.1} parent=0 // pred_fallthru
    _
  // Predicated region
  $region34: #{formula_net_sat.1} parent=0 // pred_check
    _
  $region35: #{formula_net_sat.1} parent=0 // pred_check_branch
    %39 = sbr.rel (0) target = $region37
  $region36: #{formula_net_sat.1} parent=0 // pred_region
    _
  $region37: #{formula_net_sat.1} parent=0 // pred_fallthru
    _
  // Predicated region
  $region38: #{formula_net_sat.1} parent=0 // pred_check
    _
  $region39: #{formula_net_sat.1} parent=0 // pred_check_branch
    %41 = sbr.rel (0) target = $region41
  $region40: #{formula_net_sat.1} parent=0 // pred_region
    _
  $region41: #{formula_net_sat.1} parent=0 // pred_fallthru
    _
  // Predicated region
  $region42: #{formula_net_sat.1} parent=0 // pred_check
    _
  $region43: #{formula_net_sat.1} parent=0 // pred_check_branch
    %43 = sbr.rel (0) target = $region45
  $region44: #{formula_net_sat.1} parent=0 // pred_region
    _
  $region45: #{formula_net_sat.1} parent=0 // pred_fallthru
    _
  // Predicated region
  $region46: #{formula_net_sat.1} parent=0 // pred_check
    _
  $region47: #{formula_net_sat.1} parent=0 // pred_check_branch
    %45 = sbr.rel (0) target = $region49
  $region48: #{formula_net_sat.1} parent=0 // pred_region
    _
  $region49: #{formula_net_sat.1} parent=0 // pred_fallthru
    _
  // Predicated region
  $region50: #{formula_net_sat.1} parent=0 // pred_check
    _
  $region51: #{formula_net_sat.1} parent=0 // pred_check_branch
    %47 = sbr.rel (0) target = $region53
  $region52: #{formula_net_sat.1} parent=0 // pred_region
    _
  $region53: #{formula_net_sat.1} parent=0 // pred_fallthru
    _
  // Predicated region
  $region54: #{formula_net_sat.1} parent=0 // pred_check
    _
  $region55: #{formula_net_sat.1} parent=0 // pred_check_branch
    %49 = sbr.rel (0) target = $region57
  $region56: #{formula_net_sat.1} parent=0 // pred_region
    _
  $region57: #{formula_net_sat.1} parent=0 // pred_fallthru
    _
  // Predicated region
  $region58: #{formula_net_sat.1} parent=0 // pred_check
    _
  $region59: #{formula_net_sat.1} parent=0 // pred_check_branch
    %51 = sbr.rel (0) target = $region61
  $region60: #{formula_net_sat.1} parent=0 // pred_region
    _
  $region61: #{formula_net_sat.1} parent=0 // pred_fallthru
    _
  // Predicated region
  $region62: #{formula_net_sat.1} parent=0 // pred_check
    _
  $region63: #{formula_net_sat.1} parent=0 // pred_check_branch
    %53 = sbr.rel (0) target = $region65
  $region64: #{formula_net_sat.1} parent=0 // pred_region
    _
  $region65: #{formula_net_sat.1} parent=0 // pred_fallthru
    _
  // Predicated region
  $region66: #{formula_net_sat.1} parent=0 // pred_check
    _
  $region67: #{formula_net_sat.1} parent=0 // pred_check_branch
    %55 = sbr.rel (0) target = $region69
  $region68: #{formula_net_sat.1} parent=0 // pred_region
    _
  $region69: #{formula_net_sat.1} parent=0 // pred_fallthru
    _
  %v57 = vld [vmem:[%s0] sm:$0xff]
  %v58 = vld [vmem:[%s0 + $0x8] sm:$0xff]
  %v59 = vld [vmem:[%s0 + $0x10] sm:$0xff]
  %v60 = vld [vmem:[%s0 + $0x18] sm:$0xff]
  %v61 = vld [vmem:[%s0 + $0x20] sm:$0xff]
  %v62 = vld [vmem:[%s0 + $0x28] sm:$0xff]
  %v63 = vld [vmem:[%s0 + $0x30] sm:$0xff]
  %v64 = vld [vmem:[%s0 + $0x38] sm:$0xff]
  %v65 = vld [vmem:[%s0 + $0x40] sm:$0xff]
  %v66 = vld [vmem:[%s0 + $0x48] sm:$0xff]
  %v67 = vld [vmem:[%s0 + $0x50] sm:$0xff]
  %v68 = vld [vmem:[%s0 + $0x58] sm:$0xff]
  %v69 = vld [vmem:[%s0 + $0x60] sm:$0xff]
  %v70 = vld [vmem:[%s0 + $0x68] sm:$0xff]
  %v71 = vld [vmem:[%s0 + $0x70] sm:$0xff]
  %v72 = vld [vmem:[%s0 + $0x78] sm:$0xff]
  %v73 = vld [vmem:[%s2] sm:$0xf]
  %v74 = vld [vmem:[%s2 + $0x4] sm:$0xf]
  %v75 = vld [vmem:[%s2 + $0x8] sm:$0xf]
  %v76 = vld [vmem:[%s2 + $0xc] sm:$0xf]
  %v77 = vld [vmem:[%s3] sm:$0xf]
  %v78 = vld [vmem:[%s3 + $0x4] sm:$0xf]
  %v79 = vld [vmem:[%s3 + $0x8] sm:$0xf]
  %v80 = vld [vmem:[%s3 + $0xc] sm:$0xf]
  %v81 = vld [vmem:[%s4] sm:$0xf]
  %v82 = vld [vmem:[%s4 + $0x4] sm:$0xf]
  %v83 = vld [vmem:[%s4 + $0x8] sm:$0xf]
  %v84 = vld [vmem:[%s4 + $0xc] sm:$0xf]
  %v85 = vld [vmem:[%s4 + $0x10] sm:$0xf]
  %v86 = vld [vmem:[%s4 + $0x14] sm:$0xf]
  %v87 = vld [vmem:[%s4 + $0x18] sm:$0xf]
  %v88 = vld [vmem:[%s4 + $0x1c] sm:$0xf]
  %v89 = vld [vmem:[%s4 + $0x20] sm:$0xf]
  %v90 = vld [vmem:[%s4 + $0x24] sm:$0xf]
  %v91 = vld [vmem:[%s4 + $0x28] sm:$0xf]
  %v92 = vld [vmem:[%s4 + $0x2c] sm:$0xf]
  %v93 = vld [vmem:[%s4 + $0x30] sm:$0xf]
  %v94 = vld [vmem:[%s4 + $0x34] sm:$0xf]
  %v95 = vld [vmem:[%s4 + $0x38] sm:$0xf]
  %v96 = vld [vmem:[%s4 + $0x3c] sm:$0xf]
  %v97 = vld [vmem:[%s5] sm:$0xf]
  %v98 = vld [vmem:[%s5 + $0x4] sm:$0xf]
  %v99 = vld [vmem:[%s5 + $0x8] sm:$0xf]
  %v100 = vld [vmem:[%s5 + $0xc] sm:$0xf]
  %v101 = vld [vmem:[%s5 + $0x10] sm:$0xf]
  %v102 = vld [vmem:[%s5 + $0x14] sm:$0xf]
  %v103 = vld [vmem:[%s5 + $0x18] sm:$0xf]
  %v104 = vld [vmem:[%s5 + $0x1c] sm:$0xf]
  %v105 = vld [vmem:[%s5 + $0x20] sm:$0xf]
  %v106 = vld [vmem:[%s5 + $0x24] sm:$0xf]
  %v107 = vld [vmem:[%s5 + $0x28] sm:$0xf]
  %v108 = vld [vmem:[%s5 + $0x2c] sm:$0xf]
  %v109 = vld [vmem:[%s5 + $0x30] sm:$0xf]
  %v110 = vld [vmem:[%s5 + $0x34] sm:$0xf]
  %v111 = vld [vmem:[%s5 + $0x38] sm:$0xf]
  %v112 = vld [vmem:[%s5 + $0x3c] sm:$0xf]
  %v113 = vld [vmem:[%s8] sm:$0xff]
  %v114 = vld [vmem:[%s8 + $0x8] sm:$0xff]
  %v115 = vld [vmem:[%s8 + $0x10] sm:$0xff]
  %v116 = vld [vmem:[%s8 + $0x18] sm:$0xff]
  %v117 = vld [vmem:[%s8 + $0x20] sm:$0xff]
  %v118 = vld [vmem:[%s8 + $0x28] sm:$0xff]
  %v119 = vld [vmem:[%s8 + $0x30] sm:$0xff]
  %v120 = vld [vmem:[%s8 + $0x38] sm:$0xff]
  %v121 = vld [vmem:[%s8 + $0x40] sm:$0xff]
  %v122 = vld [vmem:[%s8 + $0x48] sm:$0xff]
  %v123 = vld [vmem:[%s8 + $0x50] sm:$0xff]
  %v124 = vld [vmem:[%s8 + $0x58] sm:$0xff]
  %v125 = vld [vmem:[%s8 + $0x60] sm:$0xff]
  %v126 = vld [vmem:[%s8 + $0x68] sm:$0xff]
  %v127 = vld [vmem:[%s8 + $0x70] sm:$0xff]
  %v128 = vld [vmem:[%s8 + $0x78] sm:$0xff]
  %v129 = vld [vmem:[%s8 + $0x80] sm:$0xff]
  %v130 = vld [vmem:[%s8 + $0x88] sm:$0xff]
  %v131 = vld [vmem:[%s8 + $0x90] sm:$0xff]
  %v132 = vld [vmem:[%s8 + $0x98] sm:$0xff]
  %v133 = vld [vmem:[%s8 + $0xa0] sm:$0xff]
  %v134 = vld [vmem:[%s8 + $0xa8] sm:$0xff]
  %v135 = vld [vmem:[%s8 + $0xb0] sm:$0xff]
  %v136 = vld [vmem:[%s8 + $0xb8] sm:$0xff]
  %v137 = vld [vmem:[%s8 + $0xc0] sm:$0xff]
  %v138 = vld [vmem:[%s8 + $0xc8] sm:$0xff]
  %v139 = vld [vmem:[%s8 + $0xd0] sm:$0xff]
  %v140 = vld [vmem:[%s8 + $0xd8] sm:$0xff]
  %v141 = vld [vmem:[%s8 + $0xe0] sm:$0xff]
  %v142 = vld [vmem:[%s8 + $0xe8] sm:$0xff]
  %v143 = vld [vmem:[%s8 + $0xf0] sm:$0xff]
  %v144 = vld [vmem:[%s8 + $0xf8] sm:$0xff]
  %v145 = vld [vmem:[%s11] sm:$0xf]
  %v146 = vld [vmem:[%s11 + $0x4] sm:$0xf]
  %v147 = vld [vmem:[%s11 + $0x8] sm:$0xf]
  %v148 = vld [vmem:[%s11 + $0xc] sm:$0xf]
  %v149 = vld [vmem:[%s11 + $0x10] sm:$0xf]
  %v150 = vld [vmem:[%s11 + $0x14] sm:$0xf]
  %v151 = vld [vmem:[%s11 + $0x18] sm:$0xf]
  %v152 = vld [vmem:[%s11 + $0x1c] sm:$0xf]
  %v153 = vld [vmem:[%s11 + $0x20] sm:$0xf]
  %v154 = vld [vmem:[%s11 + $0x24] sm:$0xf]
  %v155 = vld [vmem:[%s11 + $0x28] sm:$0xf]
  %v156 = vld [vmem:[%s11 + $0x2c] sm:$0xf]
  %v157 = vld [vmem:[%s11 + $0x30] sm:$0xf]
  %v158 = vld [vmem:[%s11 + $0x34] sm:$0xf]
  %v159 = vld [vmem:[%s11 + $0x38] sm:$0xf]
  %v160 = vld [vmem:[%s11 + $0x3c] sm:$0xf]
  %v161 = vld [vmem:[%s13] sm:$0xf]
  %v162 = vld [vmem:[%s13 + $0x4] sm:$0xf]
  %v163 = vld [vmem:[%s13 + $0x8] sm:$0xf]
  %v164 = vld [vmem:[%s13 + $0xc] sm:$0xf]
  %v165 = vld [vmem:[%s13 + $0x10] sm:$0xf]
  %v166 = vld [vmem:[%s13 + $0x14] sm:$0xf]
  %v167 = vld [vmem:[%s13 + $0x18] sm:$0xf]
  %v168 = vld [vmem:[%s13 + $0x1c] sm:$0xf]
  %v169 = vld [vmem:[%s13 + $0x20] sm:$0xf]
  %v170 = vld [vmem:[%s13 + $0x24] sm:$0xf]
  %v171 = vld [vmem:[%s13 + $0x28] sm:$0xf]
  %v172 = vld [vmem:[%s13 + $0x2c] sm:$0xf]
  %v173 = vld [vmem:[%s13 + $0x30] sm:$0xf]
  %v174 = vld [vmem:[%s13 + $0x34] sm:$0xf]
  %v175 = vld [vmem:[%s13 + $0x38] sm:$0xf]
  %v176 = vld [vmem:[%s13 + $0x3c] sm:$0xf]
  %v177 = vld [vmem:[%s15] sm:$0xf]
  %v178 = vld [vmem:[%s15 + $0x4] sm:$0xf]
  %v179 = vld [vmem:[%s15 + $0x8] sm:$0xf]
  %v180 = vld [vmem:[%s15 + $0xc] sm:$0xf]
  %v181 = vld [vmem:[%s15 + $0x10] sm:$0xf]
  %v182 = vld [vmem:[%s15 + $0x14] sm:$0xf]
  %v183 = vld [vmem:[%s15 + $0x18] sm:$0xf]
  %v184 = vld [vmem:[%s15 + $0x1c] sm:$0xf]
  %v185 = vld [vmem:[%s15 + $0x20] sm:$0xf]
  %v186 = vld [vmem:[%s15 + $0x24] sm:$0xf]
  %v187 = vld [vmem:[%s15 + $0x28] sm:$0xf]
  %v188 = vld [vmem:[%s15 + $0x2c] sm:$0xf]
  %v189 = vld [vmem:[%s15 + $0x30] sm:$0xf]
  %v190 = vld [vmem:[%s15 + $0x34] sm:$0xf]
  %v191 = vld [vmem:[%s15 + $0x38] sm:$0xf]
  %v192 = vld [vmem:[%s15 + $0x3c] sm:$0xf]
  %v193 = vld [vmem:[%s12] sm:$0x1]
  %v194 = vld [vmem:[%s14] sm:$0x1]
  %v195 = vld [vmem:[%s16] sm:$0x1]
  %v196 = vld [vmem:[%s6] sm:$0xff]
  %v197 = vld [vmem:[%s6 + $0x8] sm:$0xff]
  %v198 = vld [vmem:[%s6 + $0x10] sm:$0xff]
  %v199 = vld [vmem:[%s6 + $0x18] sm:$0xff]
  %v200 = vld [vmem:[%s6 + $0x20] sm:$0xff]
  %v201 = vld [vmem:[%s6 + $0x28] sm:$0xff]
  %v202 = vld [vmem:[%s6 + $0x30] sm:$0xff]
  %v203 = vld [vmem:[%s6 + $0x38] sm:$0xff]
  %v204 = vld [vmem:[%s6 + $0x40] sm:$0xff]
  %v205 = vld [vmem:[%s6 + $0x48] sm:$0xff]
  %v206 = vld [vmem:[%s6 + $0x50] sm:$0xff]
  %v207 = vld [vmem:[%s6 + $0x58] sm:$0xff]
  %v208 = vld [vmem:[%s6 + $0x60] sm:$0xff]
  %v209 = vld [vmem:[%s6 + $0x68] sm:$0xff]
  %v210 = vld [vmem:[%s6 + $0x70] sm:$0xff]
  %v211 = vld [vmem:[%s6 + $0x78] sm:$0xff]
  %v212 = vld [vmem:[%s7] sm:$0xff]
  %v213 = vld [vmem:[%s7 + $0x8] sm:$0xff]
  %v214 = vld [vmem:[%s7 + $0x10] sm:$0xff]
  %v215 = vld [vmem:[%s7 + $0x18] sm:$0xff]
  %v216 = vld [vmem:[%s7 + $0x20] sm:$0xff]
  %v217 = vld [vmem:[%s7 + $0x28] sm:$0xff]
  %v218 = vld [vmem:[%s7 + $0x30] sm:$0xff]
  %v219 = vld [vmem:[%s7 + $0x38] sm:$0xff]
  %v220 = vld [vmem:[%s7 + $0x40] sm:$0xff]
  %v221 = vld [vmem:[%s7 + $0x48] sm:$0xff]
  %v222 = vld [vmem:[%s7 + $0x50] sm:$0xff]
  %v223 = vld [vmem:[%s7 + $0x58] sm:$0xff]
  %v224 = vld [vmem:[%s7 + $0x60] sm:$0xff]
  %v225 = vld [vmem:[%s7 + $0x68] sm:$0xff]
  %v226 = vld [vmem:[%s7 + $0x70] sm:$0xff]
  %v227 = vld [vmem:[%s7 + $0x78] sm:$0xff]
  %v228 = vld [vmem:[%s1] sm:$0xf]
  %v229 = vld [vmem:[%s1 + $0x4] sm:$0xf]
  %v230 = vld [vmem:[%s1 + $0x8] sm:$0xf]
  %v231 = vld [vmem:[%s1 + $0xc] sm:$0xf]
  %v232 = vld [vmem:[%s9] sm:$0xff]
  %v233 = vld [vmem:[%s9 + $0x8] sm:$0xff]
  %v234 = vld [vmem:[%s9 + $0x10] sm:$0xff]
  %v235 = vld [vmem:[%s9 + $0x18] sm:$0xff]
  %v236 = vld [vmem:[%s9 + $0x20] sm:$0xff]
  %v237 = vld [vmem:[%s9 + $0x28] sm:$0xff]
  %v238 = vld [vmem:[%s9 + $0x30] sm:$0xff]
  %v239 = vld [vmem:[%s9 + $0x38] sm:$0xff]
  %v240 = vld [vmem:[%s9 + $0x40] sm:$0xff]
  %v241 = vld [vmem:[%s9 + $0x48] sm:$0xff]
  %v242 = vld [vmem:[%s9 + $0x50] sm:$0xff]
  %v243 = vld [vmem:[%s9 + $0x58] sm:$0xff]
  %v244 = vld [vmem:[%s9 + $0x60] sm:$0xff]
  %v245 = vld [vmem:[%s9 + $0x68] sm:$0xff]
  %v246 = vld [vmem:[%s9 + $0x70] sm:$0xff]
  %v247 = vld [vmem:[%s9 + $0x78] sm:$0xff]
  %v248 = vld [vmem:[%s10] sm:$0x3]
  %v250 = vperm.slane %v248, 0
  %v251 = vperm.slane %v248, 1
  %v258 = vunpack.c.l.b16 %v228
  %v259 = vunpack.c.l.b16 %v229
  %v260 = vunpack.c.l.b16 %v230
  %v261 = vunpack.c.l.b16 %v231
  %v262 = vpack.c.b16 %v259, %v258
  %v263 = vpack.c.b16 %v261, %v260
  %v282 = vunpack.c.l.b16 %v232
  %v283 = vunpack.c.h.b16 %v232
  %v284 = vunpack.c.l.b16 %v233
  %v285 = vunpack.c.h.b16 %v233
  %v286 = vunpack.c.l.b16 %v234
  %v287 = vunpack.c.h.b16 %v234
  %v288 = vunpack.c.l.b16 %v235
  %v289 = vunpack.c.h.b16 %v235
  %v290 = vunpack.c.l.b16 %v236
  %v291 = vunpack.c.h.b16 %v236
  %v292 = vunpack.c.l.b16 %v237
  %v293 = vunpack.c.h.b16 %v237
  %v294 = vunpack.c.l.b16 %v238
  %v295 = vunpack.c.h.b16 %v238
  %v296 = vunpack.c.l.b16 %v239
  %v297 = vunpack.c.h.b16 %v239
  %v298 = vunpack.c.l.b16 %v240
  %v299 = vunpack.c.h.b16 %v240
  %v300 = vunpack.c.l.b16 %v241
  %v301 = vunpack.c.h.b16 %v241
  %v302 = vunpack.c.l.b16 %v242
  %v303 = vunpack.c.h.b16 %v242
  %v304 = vunpack.c.l.b16 %v243
  %v305 = vunpack.c.h.b16 %v243
  %v306 = vunpack.c.l.b16 %v244
  %v307 = vunpack.c.h.b16 %v244
  %v308 = vunpack.c.l.b16 %v245
  %v309 = vunpack.c.h.b16 %v245
  %v310 = vunpack.c.l.b16 %v246
  %v311 = vunpack.c.h.b16 %v246
  %v312 = vunpack.c.l.b16 %v247
  %v313 = vunpack.c.h.b16 %v247
  %v314 = vpack.c.b16 %v284, %v282
  %v315 = vpack.c.b16 %v285, %v283
  %v316 = vpack.c.b16 %v288, %v286
  %v317 = vpack.c.b16 %v289, %v287
  %v318 = vpack.c.b16 %v292, %v290
  %v319 = vpack.c.b16 %v293, %v291
  %v320 = vpack.c.b16 %v296, %v294
  %v321 = vpack.c.b16 %v297, %v295
  %v322 = vpack.c.b16 %v300, %v298
  %v323 = vpack.c.b16 %v301, %v299
  %v324 = vpack.c.b16 %v304, %v302
  %v325 = vpack.c.b16 %v305, %v303
  %v326 = vpack.c.b16 %v308, %v306
  %v327 = vpack.c.b16 %v309, %v307
  %v328 = vpack.c.b16 %v312, %v310
  %v329 = vpack.c.b16 %v313, %v311
  %346 = vmatpush.bf16.msra.mxu0 %v328
  %347 = vmatpush.bf16.msra.mxu0 %v326
  %348 = vmatpush.bf16.msra.mxu0 %v324
  %349 = vmatpush.bf16.msra.mxu0 %v322
  %350 = vmatpush.bf16.msra.mxu0 %v320
  %351 = vmatpush.bf16.msra.mxu0 %v318
  %352 = vmatpush.bf16.msra.mxu0 %v316
  %353 = vmatpush.bf16.msra.mxu0 %v314
  %354 = vmatmul.bf16.gmra.mxu0 %v262
  %v355 = vpop.f32.mrf.mxu0
  %v356 = vadd.f32 %v250, %v355
  %v357 = vpop.f32.mrf.mxu0
  %v358 = vadd.f32 %v250, %v357
  %359 = vmatmul.bf16.gmra.mxu0 %v263
  %v360 = vpop.f32.mrf.mxu0
  %v361 = vadd.f32 %v250, %v360
  %v362 = vpop.f32.mrf.mxu0
  %v363 = vadd.f32 %v250, %v362
  %364 = vdwg.mxu0
  %365 = vmatpush.bf16.msra.mxu0 %v329
  %366 = vmatpush.bf16.msra.mxu0 %v327
  %367 = vmatpush.bf16.msra.mxu0 %v325
  %368 = vmatpush.bf16.msra.mxu0 %v323
  %369 = vmatpush.bf16.msra.mxu0 %v321
  %370 = vmatpush.bf16.msra.mxu0 %v319
  %371 = vmatpush.bf16.msra.mxu0 %v317
  %372 = vmatpush.bf16.msra.mxu0 %v315
  %373 = vmatmul.bf16.gmra.mxu0 %v262
  %v374 = vpop.f32.mrf.mxu0
  %v375 = vadd.f32 %v251, %v374
  %v376 = vpop.f32.mrf.mxu0
  %v377 = vadd.f32 %v251, %v376
  %378 = vmatmul.bf16.gmra.mxu0 %v263
  %v379 = vpop.f32.mrf.mxu0
  %v380 = vadd.f32 %v251, %v379
  %v381 = vpop.f32.mrf.mxu0
  %v382 = vadd.f32 %v251, %v381
  %383 = vdwg.mxu0
  loop: start=0, step=1, limit=2
  $region70: #{formula_net_sat.1} parent=0 // loop_pre_header
    _
  $region71: #{formula_net_sat.1} parent=0 // loop_header
    %s385 = sphi 0, %s389
    %p386 = scmp.ge.s32.totalorder %s385, 2
    %v390 = vphi %v57, %v1455
    %v391 = vphi %v58, %v1456
    %v392 = vphi %v59, %v1457
    %v393 = vphi %v60, %v1458
    %v394 = vphi %v61, %v1459
    %v395 = vphi %v62, %v1460
    %v396 = vphi %v63, %v1461
    %v397 = vphi %v64, %v1462
    %v398 = vphi %v65, %v1463
    %v399 = vphi %v66, %v1464
    %v400 = vphi %v67, %v1465
    %v401 = vphi %v68, %v1466
    %v402 = vphi %v69, %v1467
    %v403 = vphi %v70, %v1468
    %v404 = vphi %v71, %v1469
    %v405 = vphi %v72, %v1470
  $region72: #{formula_net_sat.1} parent=0 // loop_header_branch
    %388 = sbr.rel (%p386) target = $region76
  $region73: #{formula_net_sat.1} parent=0 // loop_body
    %v406 = vpack.c.bf16 %v391, %v390
    %v407 = vpack.c.bf16 %v393, %v392
    %v408 = vpack.c.bf16 %v395, %v394
    %v409 = vpack.c.bf16 %v397, %v396
    %v410 = vpack.c.bf16 %v399, %v398
    %v411 = vpack.c.bf16 %v401, %v400
    %v412 = vpack.c.bf16 %v403, %v402
    %v413 = vpack.c.bf16 %v405, %v404
    %v418 = vunpack.c.l.b16 %v73
    %v419 = vunpack.c.l.b16 %v74
    %v420 = vunpack.c.l.b16 %v75
    %v421 = vunpack.c.l.b16 %v76
    %v422 = vpack.c.b16 %v419, %v418
    %v423 = vpack.c.b16 %v421, %v420
    %426 = vmatpush.bf16.msra.mxu0 %v413
    %427 = vmatpush.bf16.msra.mxu0 %v412
    %428 = vmatpush.bf16.msra.mxu0 %v411
    %429 = vmatpush.bf16.msra.mxu0 %v410
    %430 = vmatpush.bf16.msra.mxu0 %v409
    %431 = vmatpush.bf16.msra.mxu0 %v408
    %432 = vmatpush.bf16.msra.mxu0 %v407
    %433 = vmatpush.bf16.msra.mxu0 %v406
    %434 = vmatmul.bf16.gmra.mxu0 %v422
    %v435 = vpop.f32.mrf.mxu0
    %v436 = vadd.f32 0.0, %v435
    %v437 = vpop.f32.mrf.mxu0
    %v438 = vadd.f32 0.0, %v437
    %439 = vmatmul.bf16.gmra.mxu0 %v423
    %v440 = vpop.f32.mrf.mxu0
    %v441 = vadd.f32 0.0, %v440
    %v442 = vpop.f32.mrf.mxu0
    %v443 = vadd.f32 0.0, %v442
    %444 = vdwg.mxu0
    %v449 = vunpack.c.l.b16 %v77
    %v450 = vunpack.c.l.b16 %v78
    %v451 = vunpack.c.l.b16 %v79
    %v452 = vunpack.c.l.b16 %v80
    %v453 = vpack.c.b16 %v450, %v449
    %v454 = vpack.c.b16 %v452, %v451
    %457 = vmatpush.bf16.msra.mxu0 %v413
    %458 = vmatpush.bf16.msra.mxu0 %v412
    %459 = vmatpush.bf16.msra.mxu0 %v411
    %460 = vmatpush.bf16.msra.mxu0 %v410
    %461 = vmatpush.bf16.msra.mxu0 %v409
    %462 = vmatpush.bf16.msra.mxu0 %v408
    %463 = vmatpush.bf16.msra.mxu0 %v407
    %464 = vmatpush.bf16.msra.mxu0 %v406
    %465 = vmatmul.bf16.gmra.mxu0 %v453
    %v466 = vpop.f32.mrf.mxu0
    %v467 = vadd.f32 0.0, %v466
    %v468 = vpop.f32.mrf.mxu0
    %v469 = vadd.f32 0.0, %v468
    %470 = vmatmul.bf16.gmra.mxu0 %v454
    %v471 = vpop.f32.mrf.mxu0
    %v472 = vadd.f32 0.0, %v471
    %v473 = vpop.f32.mrf.mxu0
    %v474 = vadd.f32 0.0, %v473
    %475 = vdwg.mxu0
    %v476 = vpack.c.bf16 %v469, %v467
    %v477 = vpack.c.bf16 %v438, %v436
    %v478 = vpack.c.bf16 %v474, %v472
    %v479 = vpack.c.bf16 %v443, %v441
    %v512 = vunpack.c.l.b16 %v113
    %v513 = vunpack.c.h.b16 %v113
    %v514 = vunpack.c.l.b16 %v114
    %v515 = vunpack.c.h.b16 %v114
    %v516 = vunpack.c.l.b16 %v115
    %v517 = vunpack.c.h.b16 %v115
    %v518 = vunpack.c.l.b16 %v116
    %v519 = vunpack.c.h.b16 %v116
    %v520 = vunpack.c.l.b16 %v117
    %v521 = vunpack.c.h.b16 %v117
    %v522 = vunpack.c.l.b16 %v118
    %v523 = vunpack.c.h.b16 %v118
    %v524 = vunpack.c.l.b16 %v119
    %v525 = vunpack.c.h.b16 %v119
    %v526 = vunpack.c.l.b16 %v120
    %v527 = vunpack.c.h.b16 %v120
    %v528 = vunpack.c.l.b16 %v121
    %v529 = vunpack.c.h.b16 %v121
    %v530 = vunpack.c.l.b16 %v122
    %v531 = vunpack.c.h.b16 %v122
    %v532 = vunpack.c.l.b16 %v123
    %v533 = vunpack.c.h.b16 %v123
    %v534 = vunpack.c.l.b16 %v124
    %v535 = vunpack.c.h.b16 %v124
    %v536 = vunpack.c.l.b16 %v125
    %v537 = vunpack.c.h.b16 %v125
    %v538 = vunpack.c.l.b16 %v126
    %v539 = vunpack.c.h.b16 %v126
    %v540 = vunpack.c.l.b16 %v127
    %v541 = vunpack.c.h.b16 %v127
    %v542 = vunpack.c.l.b16 %v128
    %v543 = vunpack.c.h.b16 %v128
    %v544 = vunpack.c.l.b16 %v129
    %v545 = vunpack.c.h.b16 %v129
    %v546 = vunpack.c.l.b16 %v130
    %v547 = vunpack.c.h.b16 %v130
    %v548 = vunpack.c.l.b16 %v131
    %v549 = vunpack.c.h.b16 %v131
    %v550 = vunpack.c.l.b16 %v132
    %v551 = vunpack.c.h.b16 %v132
    %v552 = vunpack.c.l.b16 %v133
    %v553 = vunpack.c.h.b16 %v133
    %v554 = vunpack.c.l.b16 %v134
    %v555 = vunpack.c.h.b16 %v134
    %v556 = vunpack.c.l.b16 %v135
    %v557 = vunpack.c.h.b16 %v135
    %v558 = vunpack.c.l.b16 %v136
    %v559 = vunpack.c.h.b16 %v136
    %v560 = vunpack.c.l.b16 %v137
    %v561 = vunpack.c.h.b16 %v137
    %v562 = vunpack.c.l.b16 %v138
    %v563 = vunpack.c.h.b16 %v138
    %v564 = vunpack.c.l.b16 %v139
    %v565 = vunpack.c.h.b16 %v139
    %v566 = vunpack.c.l.b16 %v140
    %v567 = vunpack.c.h.b16 %v140
    %v568 = vunpack.c.l.b16 %v141
    %v569 = vunpack.c.h.b16 %v141
    %v570 = vunpack.c.l.b16 %v142
    %v571 = vunpack.c.h.b16 %v142
    %v572 = vunpack.c.l.b16 %v143
    %v573 = vunpack.c.h.b16 %v143
    %v574 = vunpack.c.l.b16 %v144
    %v575 = vunpack.c.h.b16 %v144
    %v576 = vpack.c.b16 %v514, %v512
    %v577 = vpack.c.b16 %v515, %v513
    %v578 = vpack.c.b16 %v518, %v516
    %v579 = vpack.c.b16 %v519, %v517
    %v580 = vpack.c.b16 %v522, %v520
    %v581 = vpack.c.b16 %v523, %v521
    %v582 = vpack.c.b16 %v526, %v524
    %v583 = vpack.c.b16 %v527, %v525
    %v584 = vpack.c.b16 %v530, %v528
    %v585 = vpack.c.b16 %v531, %v529
    %v586 = vpack.c.b16 %v534, %v532
    %v587 = vpack.c.b16 %v535, %v533
    %v588 = vpack.c.b16 %v538, %v536
    %v589 = vpack.c.b16 %v539, %v537
    %v590 = vpack.c.b16 %v542, %v540
    %v591 = vpack.c.b16 %v543, %v541
    %v592 = vpack.c.b16 %v546, %v544
    %v593 = vpack.c.b16 %v547, %v545
    %v594 = vpack.c.b16 %v550, %v548
    %v595 = vpack.c.b16 %v551, %v549
    %v596 = vpack.c.b16 %v554, %v552
    %v597 = vpack.c.b16 %v555, %v553
    %v598 = vpack.c.b16 %v558, %v556
    %v599 = vpack.c.b16 %v559, %v557
    %v600 = vpack.c.b16 %v562, %v560
    %v601 = vpack.c.b16 %v563, %v561
    %v602 = vpack.c.b16 %v566, %v564
    %v603 = vpack.c.b16 %v567, %v565
    %v604 = vpack.c.b16 %v570, %v568
    %v605 = vpack.c.b16 %v571, %v569
    %v606 = vpack.c.b16 %v574, %v572
    %v607 = vpack.c.b16 %v575, %v573
    %640 = vmatpush.bf16.msra.mxu0 %v590
    %641 = vmatpush.bf16.msra.mxu0 %v588
    %642 = vmatpush.bf16.msra.mxu0 %v586
    %643 = vmatpush.bf16.msra.mxu0 %v584
    %644 = vmatpush.bf16.msra.mxu0 %v582
    %645 = vmatpush.bf16.msra.mxu0 %v580
    %646 = vmatpush.bf16.msra.mxu0 %v578
    %647 = vmatpush.bf16.msra.mxu0 %v576
    %648 = vmatmul.bf16.gmra.mxu0 %v476
    %v649 = vpop.f32.mrf.mxu0
    %v650 = vadd.f32 %v356, %v649
    %v651 = vpop.f32.mrf.mxu0
    %v652 = vadd.f32 %v358, %v651
    %653 = vmatmul.bf16.gmra.mxu0 %v478
    %v654 = vpop.f32.mrf.mxu0
    %v655 = vadd.f32 %v361, %v654
    %v656 = vpop.f32.mrf.mxu0
    %v657 = vadd.f32 %v363, %v656
    %658 = vdwg.mxu0
    %659 = vmatpush.bf16.msra.mxu0 %v606
    %660 = vmatpush.bf16.msra.mxu0 %v604
    %661 = vmatpush.bf16.msra.mxu0 %v602
    %662 = vmatpush.bf16.msra.mxu0 %v600
    %663 = vmatpush.bf16.msra.mxu0 %v598
    %664 = vmatpush.bf16.msra.mxu0 %v596
    %665 = vmatpush.bf16.msra.mxu0 %v594
    %666 = vmatpush.bf16.msra.mxu0 %v592
    %667 = vmatmul.bf16.gmra.mxu0 %v477
    %v668 = vpop.f32.mrf.mxu0
    %v669 = vadd.f32 %v650, %v668
    %v670 = vpop.f32.mrf.mxu0
    %v671 = vadd.f32 %v652, %v670
    %672 = vmatmul.bf16.gmra.mxu0 %v479
    %v673 = vpop.f32.mrf.mxu0
    %v674 = vadd.f32 %v655, %v673
    %v675 = vpop.f32.mrf.mxu0
    %v676 = vadd.f32 %v657, %v675
    %677 = vdwg.mxu0
    %678 = vmatpush.bf16.msra.mxu0 %v591
    %679 = vmatpush.bf16.msra.mxu0 %v589
    %680 = vmatpush.bf16.msra.mxu0 %v587
    %681 = vmatpush.bf16.msra.mxu0 %v585
    %682 = vmatpush.bf16.msra.mxu0 %v583
    %683 = vmatpush.bf16.msra.mxu0 %v581
    %684 = vmatpush.bf16.msra.mxu0 %v579
    %685 = vmatpush.bf16.msra.mxu0 %v577
    %686 = vmatmul.bf16.gmra.mxu0 %v476
    %v687 = vpop.f32.mrf.mxu0
    %v688 = vadd.f32 %v375, %v687
    %v689 = vpop.f32.mrf.mxu0
    %v690 = vadd.f32 %v377, %v689
    %691 = vmatmul.bf16.gmra.mxu0 %v478
    %v692 = vpop.f32.mrf.mxu0
    %v693 = vadd.f32 %v380, %v692
    %v694 = vpop.f32.mrf.mxu0
    %v695 = vadd.f32 %v382, %v694
    %696 = vdwg.mxu0
    %697 = vmatpush.bf16.msra.mxu0 %v607
    %698 = vmatpush.bf16.msra.mxu0 %v605
    %699 = vmatpush.bf16.msra.mxu0 %v603
    %700 = vmatpush.bf16.msra.mxu0 %v601
    %701 = vmatpush.bf16.msra.mxu0 %v599
    %702 = vmatpush.bf16.msra.mxu0 %v597
    %703 = vmatpush.bf16.msra.mxu0 %v595
    %704 = vmatpush.bf16.msra.mxu0 %v593
    %705 = vmatmul.bf16.gmra.mxu0 %v477
    %v706 = vpop.f32.mrf.mxu0
    %v707 = vadd.f32 %v688, %v706
    %v708 = vpop.f32.mrf.mxu0
    %v709 = vadd.f32 %v690, %v708
    %710 = vmatmul.bf16.gmra.mxu0 %v479
    %v711 = vpop.f32.mrf.mxu0
    %v712 = vadd.f32 %v693, %v711
    %v713 = vpop.f32.mrf.mxu0
    %v714 = vadd.f32 %v695, %v713
    %715 = vdwg.mxu0
    %v716 = vmax.f32 %v669, 0.0
    %v717 = vmax.f32 %v707, 0.0
    %v718 = vmax.f32 %v671, 0.0
    %v719 = vmax.f32 %v709, 0.0
    %v720 = vmax.f32 %v674, 0.0
    %v721 = vmax.f32 %v712, 0.0
    %v722 = vmax.f32 %v676, 0.0
    %v723 = vmax.f32 %v714, 0.0
    %v724 = vpack.c.bf16 %v718, %v716
    %v725 = vpack.c.bf16 %v722, %v720
    %v726 = vpack.c.bf16 %v719, %v717
    %v727 = vpack.c.bf16 %v723, %v721
    %v729 = vperm.slane %v193, 0
    %v747 = vunpack.c.l.b16 %v145
    %v748 = vunpack.c.l.b16 %v146
    %v749 = vunpack.c.l.b16 %v147
    %v750 = vunpack.c.l.b16 %v148
    %v751 = vunpack.c.l.b16 %v149
    %v752 = vunpack.c.l.b16 %v150
    %v753 = vunpack.c.l.b16 %v151
    %v754 = vunpack.c.l.b16 %v152
    %v755 = vunpack.c.l.b16 %v153
    %v756 = vunpack.c.l.b16 %v154
    %v757 = vunpack.c.l.b16 %v155
    %v758 = vunpack.c.l.b16 %v156
    %v759 = vunpack.c.l.b16 %v157
    %v760 = vunpack.c.l.b16 %v158
    %v761 = vunpack.c.l.b16 %v159
    %v762 = vunpack.c.l.b16 %v160
    %v763 = vpack.c.b16 %v748, %v747
    %v764 = vpack.c.b16 %v750, %v749
    %v765 = vpack.c.b16 %v752, %v751
    %v766 = vpack.c.b16 %v754, %v753
    %v767 = vpack.c.b16 %v756, %v755
    %v768 = vpack.c.b16 %v758, %v757
    %v769 = vpack.c.b16 %v760, %v759
    %v770 = vpack.c.b16 %v762, %v761
    %779 = vmatpush.bf16.msra.mxu0 %v770
    %780 = vmatpush.bf16.msra.mxu0 %v769
    %781 = vmatpush.bf16.msra.mxu0 %v768
    %782 = vmatpush.bf16.msra.mxu0 %v767
    %783 = vmatpush.bf16.msra.mxu0 %v766
    %784 = vmatpush.bf16.msra.mxu0 %v765
    %785 = vmatpush.bf16.msra.mxu0 %v764
    %786 = vmatpush.bf16.msra.mxu0 %v763
    %787 = vmatmul.bf16.gmra.mxu0 %v724
    %v788 = vpop.f32.mrf.mxu0
    %v789 = vadd.f32 %v729, %v788
    %v790 = vpop.f32.mrf.mxu0
    %v791 = vadd.f32 %v729, %v790
    %792 = vmatmul.bf16.gmra.mxu0 %v725
    %v793 = vpop.f32.mrf.mxu0
    %v794 = vadd.f32 %v729, %v793
    %v795 = vpop.f32.mrf.mxu0
    %v796 = vadd.f32 %v729, %v795
    %797 = vdwg.mxu0
    %v798 = vmax.f32 %v789, 0.0
    %v799 = vmax.f32 %v791, 0.0
    %v800 = vmax.f32 %v794, 0.0
    %v801 = vmax.f32 %v796, 0.0
    %v802 = vpack.c.bf16 %v799, %v798
    %v803 = vpack.c.bf16 %v801, %v800
    %v805 = vperm.slane %v194, 0
    %v823 = vunpack.c.l.b16 %v161
    %v824 = vunpack.c.l.b16 %v162
    %v825 = vunpack.c.l.b16 %v163
    %v826 = vunpack.c.l.b16 %v164
    %v827 = vunpack.c.l.b16 %v165
    %v828 = vunpack.c.l.b16 %v166
    %v829 = vunpack.c.l.b16 %v167
    %v830 = vunpack.c.l.b16 %v168
    %v831 = vunpack.c.l.b16 %v169
    %v832 = vunpack.c.l.b16 %v170
    %v833 = vunpack.c.l.b16 %v171
    %v834 = vunpack.c.l.b16 %v172
    %v835 = vunpack.c.l.b16 %v173
    %v836 = vunpack.c.l.b16 %v174
    %v837 = vunpack.c.l.b16 %v175
    %v838 = vunpack.c.l.b16 %v176
    %v839 = vpack.c.b16 %v824, %v823
    %v840 = vpack.c.b16 %v826, %v825
    %v841 = vpack.c.b16 %v828, %v827
    %v842 = vpack.c.b16 %v830, %v829
    %v843 = vpack.c.b16 %v832, %v831
    %v844 = vpack.c.b16 %v834, %v833
    %v845 = vpack.c.b16 %v836, %v835
    %v846 = vpack.c.b16 %v838, %v837
    %855 = vmatpush.bf16.msra.mxu0 %v846
    %856 = vmatpush.bf16.msra.mxu0 %v845
    %857 = vmatpush.bf16.msra.mxu0 %v844
    %858 = vmatpush.bf16.msra.mxu0 %v843
    %859 = vmatpush.bf16.msra.mxu0 %v842
    %860 = vmatpush.bf16.msra.mxu0 %v841
    %861 = vmatpush.bf16.msra.mxu0 %v840
    %862 = vmatpush.bf16.msra.mxu0 %v839
    %863 = vmatmul.bf16.gmra.mxu0 %v726
    %v864 = vpop.f32.mrf.mxu0
    %v865 = vadd.f32 %v805, %v864
    %v866 = vpop.f32.mrf.mxu0
    %v867 = vadd.f32 %v805, %v866
    %868 = vmatmul.bf16.gmra.mxu0 %v727
    %v869 = vpop.f32.mrf.mxu0
    %v870 = vadd.f32 %v805, %v869
    %v871 = vpop.f32.mrf.mxu0
    %v872 = vadd.f32 %v805, %v871
    %873 = vdwg.mxu0
    %v874 = vmax.f32 %v865, 0.0
    %v875 = vmax.f32 %v867, 0.0
    %v876 = vmax.f32 %v870, 0.0
    %v877 = vmax.f32 %v872, 0.0
    %v878 = vpack.c.bf16 %v875, %v874
    %v879 = vpack.c.bf16 %v877, %v876
    %v896 = vunpack.c.l.b16 %v97
    %v897 = vunpack.c.l.b16 %v98
    %v898 = vunpack.c.l.b16 %v99
    %v899 = vunpack.c.l.b16 %v100
    %v900 = vunpack.c.l.b16 %v101
    %v901 = vunpack.c.l.b16 %v102
    %v902 = vunpack.c.l.b16 %v103
    %v903 = vunpack.c.l.b16 %v104
    %v904 = vunpack.c.l.b16 %v105
    %v905 = vunpack.c.l.b16 %v106
    %v906 = vunpack.c.l.b16 %v107
    %v907 = vunpack.c.l.b16 %v108
    %v908 = vunpack.c.l.b16 %v109
    %v909 = vunpack.c.l.b16 %v110
    %v910 = vunpack.c.l.b16 %v111
    %v911 = vunpack.c.l.b16 %v112
    %v912 = vpack.c.b16 %v897, %v896
    %v913 = vpack.c.b16 %v899, %v898
    %v914 = vpack.c.b16 %v901, %v900
    %v915 = vpack.c.b16 %v903, %v902
    %v916 = vpack.c.b16 %v905, %v904
    %v917 = vpack.c.b16 %v907, %v906
    %v918 = vpack.c.b16 %v909, %v908
    %v919 = vpack.c.b16 %v911, %v910
    %vm920 = vcmask 261120
    %v922 = vsel %vm920, %v912, 0
    %v925 = vsel %vm920, %v913, 0
    %v928 = vsel %vm920, %v914, 0
    %v931 = vsel %vm920, %v915, 0
    %v934 = vsel %vm920, %v916, 0
    %v937 = vsel %vm920, %v917, 0
    %v940 = vsel %vm920, %v918, 0
    %v943 = vsel %vm920, %v919, 0
    %945 = vmatpush.bf16.msra.mxu0 0
    %946 = vmatpush.bf16.msra.mxu0 0
    %947 = vmatpush.bf16.msra.mxu0 0
    %948 = vmatpush.bf16.msra.mxu0 0
    %949 = vmatpush.bf16.msra.mxu0 0
    %950 = vmatpush.bf16.msra.mxu0 0
    %951 = vmatpush.bf16.msra.mxu0 %v803
    %952 = vmatpush.bf16.msra.mxu0 %v802
    %953 = vmatmul.bf16.gmra.mxu0 %v922
    %v954 = vpop.f32.mrf.mxu0
    %v955 = vadd.f32 0.0, %v954
    %v956 = vpop.f32.mrf.mxu0
    %v957 = vadd.f32 0.0, %v956
    %958 = vmatmul.bf16.gmra.mxu0 %v925
    %v959 = vpop.f32.mrf.mxu0
    %v960 = vadd.f32 0.0, %v959
    %v961 = vpop.f32.mrf.mxu0
    %v962 = vadd.f32 0.0, %v961
    %963 = vmatmul.bf16.gmra.mxu0 %v928
    %v964 = vpop.f32.mrf.mxu0
    %v965 = vadd.f32 0.0, %v964
    %v966 = vpop.f32.mrf.mxu0
    %v967 = vadd.f32 0.0, %v966
    %968 = vmatmul.bf16.gmra.mxu0 %v931
    %v969 = vpop.f32.mrf.mxu0
    %v970 = vadd.f32 0.0, %v969
    %v971 = vpop.f32.mrf.mxu0
    %v972 = vadd.f32 0.0, %v971
    %973 = vmatmul.bf16.gmra.mxu0 %v934
    %v974 = vpop.f32.mrf.mxu0
    %v975 = vadd.f32 0.0, %v974
    %v976 = vpop.f32.mrf.mxu0
    %v977 = vadd.f32 0.0, %v976
    %978 = vmatmul.bf16.gmra.mxu0 %v937
    %v979 = vpop.f32.mrf.mxu0
    %v980 = vadd.f32 0.0, %v979
    %v981 = vpop.f32.mrf.mxu0
    %v982 = vadd.f32 0.0, %v981
    %983 = vmatmul.bf16.gmra.mxu0 %v940
    %v984 = vpop.f32.mrf.mxu0
    %v985 = vadd.f32 0.0, %v984
    %v986 = vpop.f32.mrf.mxu0
    %v987 = vadd.f32 0.0, %v986
    %988 = vmatmul.bf16.gmra.mxu0 %v943
    %v989 = vpop.f32.mrf.mxu0
    %v990 = vadd.f32 0.0, %v989
    %v991 = vpop.f32.mrf.mxu0
    %v992 = vadd.f32 0.0, %v991
    %993 = vdwg.mxu0
    %995 = vset.pattern.permute.xlu0 0
    %996 = vperm.xlu0 %995, %v212
    %v997 = vpop.permute.xlu0 %996
    %1000 = vset.pattern.permute.xlu0 0
    %1001 = vperm.xlu0 %1000, %v213
    %v1002 = vpop.permute.xlu0 %1001
    %1005 = vset.pattern.permute.xlu0 0
    %1006 = vperm.xlu0 %1005, %v214
    %v1007 = vpop.permute.xlu0 %1006
    %1010 = vset.pattern.permute.xlu0 0
    %1011 = vperm.xlu0 %1010, %v215
    %v1012 = vpop.permute.xlu0 %1011
    %1015 = vset.pattern.permute.xlu0 0
    %1016 = vperm.xlu0 %1015, %v216
    %v1017 = vpop.permute.xlu0 %1016
    %1020 = vset.pattern.permute.xlu0 0
    %1021 = vperm.xlu0 %1020, %v217
    %v1022 = vpop.permute.xlu0 %1021
    %1025 = vset.pattern.permute.xlu0 0
    %1026 = vperm.xlu0 %1025, %v218
    %v1027 = vpop.permute.xlu0 %1026
    %1030 = vset.pattern.permute.xlu0 0
    %1031 = vperm.xlu0 %1030, %v219
    %v1032 = vpop.permute.xlu0 %1031
    %1035 = vset.pattern.permute.xlu0 0
    %1036 = vperm.xlu0 %1035, %v220
    %v1037 = vpop.permute.xlu0 %1036
    %1040 = vset.pattern.permute.xlu0 0
    %1041 = vperm.xlu0 %1040, %v221
    %v1042 = vpop.permute.xlu0 %1041
    %1045 = vset.pattern.permute.xlu0 0
    %1046 = vperm.xlu0 %1045, %v222
    %v1047 = vpop.permute.xlu0 %1046
    %1050 = vset.pattern.permute.xlu0 0
    %1051 = vperm.xlu0 %1050, %v223
    %v1052 = vpop.permute.xlu0 %1051
    %1055 = vset.pattern.permute.xlu0 0
    %1056 = vperm.xlu0 %1055, %v224
    %v1057 = vpop.permute.xlu0 %1056
    %1060 = vset.pattern.permute.xlu0 0
    %1061 = vperm.xlu0 %1060, %v225
    %v1062 = vpop.permute.xlu0 %1061
    %1065 = vset.pattern.permute.xlu0 0
    %1066 = vperm.xlu0 %1065, %v226
    %v1067 = vpop.permute.xlu0 %1066
    %1070 = vset.pattern.permute.xlu0 0
    %1071 = vperm.xlu0 %1070, %v227
    %v1072 = vpop.permute.xlu0 %1071
    %v1074 = vmul.f32 %v997, %v955
    %v1075 = vmul.f32 %v1002, %v957
    %v1076 = vmul.f32 %v1007, %v960
    %v1077 = vmul.f32 %v1012, %v962
    %v1078 = vmul.f32 %v1017, %v965
    %v1079 = vmul.f32 %v1022, %v967
    %v1080 = vmul.f32 %v1027, %v970
    %v1081 = vmul.f32 %v1032, %v972
    %v1082 = vmul.f32 %v1037, %v975
    %v1083 = vmul.f32 %v1042, %v977
    %v1084 = vmul.f32 %v1047, %v980
    %v1085 = vmul.f32 %v1052, %v982
    %v1086 = vmul.f32 %v1057, %v985
    %v1087 = vmul.f32 %v1062, %v987
    %v1088 = vmul.f32 %v1067, %v990
    %v1089 = vmul.f32 %v1072, %v992
    %v1106 = vunpack.c.l.b16 %v81
    %v1107 = vunpack.c.l.b16 %v82
    %v1108 = vunpack.c.l.b16 %v83
    %v1109 = vunpack.c.l.b16 %v84
    %v1110 = vunpack.c.l.b16 %v85
    %v1111 = vunpack.c.l.b16 %v86
    %v1112 = vunpack.c.l.b16 %v87
    %v1113 = vunpack.c.l.b16 %v88
    %v1114 = vunpack.c.l.b16 %v89
    %v1115 = vunpack.c.l.b16 %v90
    %v1116 = vunpack.c.l.b16 %v91
    %v1117 = vunpack.c.l.b16 %v92
    %v1118 = vunpack.c.l.b16 %v93
    %v1119 = vunpack.c.l.b16 %v94
    %v1120 = vunpack.c.l.b16 %v95
    %v1121 = vunpack.c.l.b16 %v96
    %v1122 = vpack.c.b16 %v1107, %v1106
    %v1123 = vpack.c.b16 %v1109, %v1108
    %v1124 = vpack.c.b16 %v1111, %v1110
    %v1125 = vpack.c.b16 %v1113, %v1112
    %v1126 = vpack.c.b16 %v1115, %v1114
    %v1127 = vpack.c.b16 %v1117, %v1116
    %v1128 = vpack.c.b16 %v1119, %v1118
    %v1129 = vpack.c.b16 %v1121, %v1120
    %v1131 = vsel %vm920, %v1122, 0
    %v1134 = vsel %vm920, %v1123, 0
    %v1137 = vsel %vm920, %v1124, 0
    %v1140 = vsel %vm920, %v1125, 0
    %v1143 = vsel %vm920, %v1126, 0
    %v1146 = vsel %vm920, %v1127, 0
    %v1149 = vsel %vm920, %v1128, 0
    %v1152 = vsel %vm920, %v1129, 0
    %1154 = vmatpush.bf16.msra.mxu0 0
    %1155 = vmatpush.bf16.msra.mxu0 0
    %1156 = vmatpush.bf16.msra.mxu0 0
    %1157 = vmatpush.bf16.msra.mxu0 0
    %1158 = vmatpush.bf16.msra.mxu0 0
    %1159 = vmatpush.bf16.msra.mxu0 0
    %1160 = vmatpush.bf16.msra.mxu0 %v879
    %1161 = vmatpush.bf16.msra.mxu0 %v878
    %1162 = vmatmul.bf16.gmra.mxu0 %v1131
    %v1163 = vpop.f32.mrf.mxu0
    %v1164 = vadd.f32 0.0, %v1163
    %v1165 = vpop.f32.mrf.mxu0
    %v1166 = vadd.f32 0.0, %v1165
    %1167 = vmatmul.bf16.gmra.mxu0 %v1134
    %v1168 = vpop.f32.mrf.mxu0
    %v1169 = vadd.f32 0.0, %v1168
    %v1170 = vpop.f32.mrf.mxu0
    %v1171 = vadd.f32 0.0, %v1170
    %1172 = vmatmul.bf16.gmra.mxu0 %v1137
    %v1173 = vpop.f32.mrf.mxu0
    %v1174 = vadd.f32 0.0, %v1173
    %v1175 = vpop.f32.mrf.mxu0
    %v1176 = vadd.f32 0.0, %v1175
    %1177 = vmatmul.bf16.gmra.mxu0 %v1140
    %v1178 = vpop.f32.mrf.mxu0
    %v1179 = vadd.f32 0.0, %v1178
    %v1180 = vpop.f32.mrf.mxu0
    %v1181 = vadd.f32 0.0, %v1180
    %1182 = vmatmul.bf16.gmra.mxu0 %v1143
    %v1183 = vpop.f32.mrf.mxu0
    %v1184 = vadd.f32 0.0, %v1183
    %v1185 = vpop.f32.mrf.mxu0
    %v1186 = vadd.f32 0.0, %v1185
    %1187 = vmatmul.bf16.gmra.mxu0 %v1146
    %v1188 = vpop.f32.mrf.mxu0
    %v1189 = vadd.f32 0.0, %v1188
    %v1190 = vpop.f32.mrf.mxu0
    %v1191 = vadd.f32 0.0, %v1190
    %1192 = vmatmul.bf16.gmra.mxu0 %v1149
    %v1193 = vpop.f32.mrf.mxu0
    %v1194 = vadd.f32 0.0, %v1193
    %v1195 = vpop.f32.mrf.mxu0
    %v1196 = vadd.f32 0.0, %v1195
    %1197 = vmatmul.bf16.gmra.mxu0 %v1152
    %v1198 = vpop.f32.mrf.mxu0
    %v1199 = vadd.f32 0.0, %v1198
    %v1200 = vpop.f32.mrf.mxu0
    %v1201 = vadd.f32 0.0, %v1200
    %1202 = vdwg.mxu0
    %1204 = vset.pattern.permute.xlu0 0
    %1205 = vperm.xlu0 %1204, %v196
    %v1206 = vpop.permute.xlu0 %1205
    %1209 = vset.pattern.permute.xlu0 0
    %1210 = vperm.xlu0 %1209, %v197
    %v1211 = vpop.permute.xlu0 %1210
    %1214 = vset.pattern.permute.xlu0 0
    %1215 = vperm.xlu0 %1214, %v198
    %v1216 = vpop.permute.xlu0 %1215
    %1219 = vset.pattern.permute.xlu0 0
    %1220 = vperm.xlu0 %1219, %v199
    %v1221 = vpop.permute.xlu0 %1220
    %1224 = vset.pattern.permute.xlu0 0
    %1225 = vperm.xlu0 %1224, %v200
    %v1226 = vpop.permute.xlu0 %1225
    %1229 = vset.pattern.permute.xlu0 0
    %1230 = vperm.xlu0 %1229, %v201
    %v1231 = vpop.permute.xlu0 %1230
    %1234 = vset.pattern.permute.xlu0 0
    %1235 = vperm.xlu0 %1234, %v202
    %v1236 = vpop.permute.xlu0 %1235
    %1239 = vset.pattern.permute.xlu0 0
    %1240 = vperm.xlu0 %1239, %v203
    %v1241 = vpop.permute.xlu0 %1240
    %1244 = vset.pattern.permute.xlu0 0
    %1245 = vperm.xlu0 %1244, %v204
    %v1246 = vpop.permute.xlu0 %1245
    %1249 = vset.pattern.permute.xlu0 0
    %1250 = vperm.xlu0 %1249, %v205
    %v1251 = vpop.permute.xlu0 %1250
    %1254 = vset.pattern.permute.xlu0 0
    %1255 = vperm.xlu0 %1254, %v206
    %v1256 = vpop.permute.xlu0 %1255
    %1259 = vset.pattern.permute.xlu0 0
    %1260 = vperm.xlu0 %1259, %v207
    %v1261 = vpop.permute.xlu0 %1260
    %1264 = vset.pattern.permute.xlu0 0
    %1265 = vperm.xlu0 %1264, %v208
    %v1266 = vpop.permute.xlu0 %1265
    %1269 = vset.pattern.permute.xlu0 0
    %1270 = vperm.xlu0 %1269, %v209
    %v1271 = vpop.permute.xlu0 %1270
    %1274 = vset.pattern.permute.xlu0 0
    %1275 = vperm.xlu0 %1274, %v210
    %v1276 = vpop.permute.xlu0 %1275
    %1279 = vset.pattern.permute.xlu0 0
    %1280 = vperm.xlu0 %1279, %v211
    %v1281 = vpop.permute.xlu0 %1280
    %v1283 = vmul.f32 %v1206, %v1164
    %v1284 = vmul.f32 %v1211, %v1166
    %v1285 = vmul.f32 %v1216, %v1169
    %v1286 = vmul.f32 %v1221, %v1171
    %v1287 = vmul.f32 %v1226, %v1174
    %v1288 = vmul.f32 %v1231, %v1176
    %v1289 = vmul.f32 %v1236, %v1179
    %v1290 = vmul.f32 %v1241, %v1181
    %v1291 = vmul.f32 %v1246, %v1184
    %v1292 = vmul.f32 %v1251, %v1186
    %v1293 = vmul.f32 %v1256, %v1189
    %v1294 = vmul.f32 %v1261, %v1191
    %v1295 = vmul.f32 %v1266, %v1194
    %v1296 = vmul.f32 %v1271, %v1196
    %v1297 = vmul.f32 %v1276, %v1199
    %v1298 = vmul.f32 %v1281, %v1201
    %v1299 = vadd.f32 %v390, %v1074
    %v1300 = vadd.f32 %v391, %v1075
    %v1301 = vadd.f32 %v392, %v1076
    %v1302 = vadd.f32 %v393, %v1077
    %v1303 = vadd.f32 %v394, %v1078
    %v1304 = vadd.f32 %v395, %v1079
    %v1305 = vadd.f32 %v396, %v1080
    %v1306 = vadd.f32 %v397, %v1081
    %v1307 = vadd.f32 %v398, %v1082
    %v1308 = vadd.f32 %v399, %v1083
    %v1309 = vadd.f32 %v400, %v1084
    %v1310 = vadd.f32 %v401, %v1085
    %v1311 = vadd.f32 %v402, %v1086
    %v1312 = vadd.f32 %v403, %v1087
    %v1313 = vadd.f32 %v404, %v1088
    %v1314 = vadd.f32 %v405, %v1089
    %v1315 = vadd.f32 %v1299, %v1283
    %v1316 = vadd.f32 %v1300, %v1284
    %v1317 = vadd.f32 %v1301, %v1285
    %v1318 = vadd.f32 %v1302, %v1286
    %v1319 = vadd.f32 %v1303, %v1287
    %v1320 = vadd.f32 %v1304, %v1288
    %v1321 = vadd.f32 %v1305, %v1289
    %v1322 = vadd.f32 %v1306, %v1290
    %v1323 = vadd.f32 %v1307, %v1291
    %v1324 = vadd.f32 %v1308, %v1292
    %v1325 = vadd.f32 %v1309, %v1293
    %v1326 = vadd.f32 %v1310, %v1294
    %v1327 = vadd.f32 %v1311, %v1295
    %v1328 = vadd.f32 %v1312, %v1296
    %v1329 = vadd.f32 %v1313, %v1297
    %v1330 = vadd.f32 %v1314, %v1298
    %v1331 = vpack.c.bf16 %v1316, %v1315
    %v1332 = vpack.c.bf16 %v1318, %v1317
    %v1333 = vpack.c.bf16 %v1320, %v1319
    %v1334 = vpack.c.bf16 %v1322, %v1321
    %v1335 = vpack.c.bf16 %v1324, %v1323
    %v1336 = vpack.c.bf16 %v1326, %v1325
    %v1337 = vpack.c.bf16 %v1328, %v1327
    %v1338 = vpack.c.bf16 %v1330, %v1329
    %v1340 = vperm.slane %v195, 0
    %v1358 = vunpack.c.l.b16 %v177
    %v1359 = vunpack.c.l.b16 %v178
    %v1360 = vunpack.c.l.b16 %v179
    %v1361 = vunpack.c.l.b16 %v180
    %v1362 = vunpack.c.l.b16 %v181
    %v1363 = vunpack.c.l.b16 %v182
    %v1364 = vunpack.c.l.b16 %v183
    %v1365 = vunpack.c.l.b16 %v184
    %v1366 = vunpack.c.l.b16 %v185
    %v1367 = vunpack.c.l.b16 %v186
    %v1368 = vunpack.c.l.b16 %v187
    %v1369 = vunpack.c.l.b16 %v188
    %v1370 = vunpack.c.l.b16 %v189
    %v1371 = vunpack.c.l.b16 %v190
    %v1372 = vunpack.c.l.b16 %v191
    %v1373 = vunpack.c.l.b16 %v192
    %v1374 = vpack.c.b16 %v1359, %v1358
    %v1375 = vpack.c.b16 %v1361, %v1360
    %v1376 = vpack.c.b16 %v1363, %v1362
    %v1377 = vpack.c.b16 %v1365, %v1364
    %v1378 = vpack.c.b16 %v1367, %v1366
    %v1379 = vpack.c.b16 %v1369, %v1368
    %v1380 = vpack.c.b16 %v1371, %v1370
    %v1381 = vpack.c.b16 %v1373, %v1372
    %1390 = vmatpush.bf16.msra.mxu0 %v1381
    %1391 = vmatpush.bf16.msra.mxu0 %v1380
    %1392 = vmatpush.bf16.msra.mxu0 %v1379
    %1393 = vmatpush.bf16.msra.mxu0 %v1378
    %1394 = vmatpush.bf16.msra.mxu0 %v1377
    %1395 = vmatpush.bf16.msra.mxu0 %v1376
    %1396 = vmatpush.bf16.msra.mxu0 %v1375
    %1397 = vmatpush.bf16.msra.mxu0 %v1374
    %1398 = vmatmul.bf16.gmra.mxu0 %v1331
    %v1399 = vpop.f32.mrf.mxu0
    %v1400 = vadd.f32 %v1340, %v1399
    %v1401 = vpop.f32.mrf.mxu0
    %v1402 = vadd.f32 %v1340, %v1401
    %1403 = vmatmul.bf16.gmra.mxu0 %v1332
    %v1404 = vpop.f32.mrf.mxu0
    %v1405 = vadd.f32 %v1340, %v1404
    %v1406 = vpop.f32.mrf.mxu0
    %v1407 = vadd.f32 %v1340, %v1406
    %1408 = vmatmul.bf16.gmra.mxu0 %v1333
    %v1409 = vpop.f32.mrf.mxu0
    %v1410 = vadd.f32 %v1340, %v1409
    %v1411 = vpop.f32.mrf.mxu0
    %v1412 = vadd.f32 %v1340, %v1411
    %1413 = vmatmul.bf16.gmra.mxu0 %v1334
    %v1414 = vpop.f32.mrf.mxu0
    %v1415 = vadd.f32 %v1340, %v1414
    %v1416 = vpop.f32.mrf.mxu0
    %v1417 = vadd.f32 %v1340, %v1416
    %1418 = vmatmul.bf16.gmra.mxu0 %v1335
    %v1419 = vpop.f32.mrf.mxu0
    %v1420 = vadd.f32 %v1340, %v1419
    %v1421 = vpop.f32.mrf.mxu0
    %v1422 = vadd.f32 %v1340, %v1421
    %1423 = vmatmul.bf16.gmra.mxu0 %v1336
    %v1424 = vpop.f32.mrf.mxu0
    %v1425 = vadd.f32 %v1340, %v1424
    %v1426 = vpop.f32.mrf.mxu0
    %v1427 = vadd.f32 %v1340, %v1426
    %1428 = vmatmul.bf16.gmra.mxu0 %v1337
    %v1429 = vpop.f32.mrf.mxu0
    %v1430 = vadd.f32 %v1340, %v1429
    %v1431 = vpop.f32.mrf.mxu0
    %v1432 = vadd.f32 %v1340, %v1431
    %1433 = vmatmul.bf16.gmra.mxu0 %v1338
    %v1434 = vpop.f32.mrf.mxu0
    %v1435 = vadd.f32 %v1340, %v1434
    %v1436 = vpop.f32.mrf.mxu0
    %v1437 = vadd.f32 %v1340, %v1436
    %1438 = vdwg.mxu0
    %v1439 = vmax.f32 %v1400, 0.0
    %v1440 = vmax.f32 %v1402, 0.0
    %v1441 = vmax.f32 %v1405, 0.0
    %v1442 = vmax.f32 %v1407, 0.0
    %v1443 = vmax.f32 %v1410, 0.0
    %v1444 = vmax.f32 %v1412, 0.0
    %v1445 = vmax.f32 %v1415, 0.0
    %v1446 = vmax.f32 %v1417, 0.0
    %v1447 = vmax.f32 %v1420, 0.0
    %v1448 = vmax.f32 %v1422, 0.0
    %v1449 = vmax.f32 %v1425, 0.0
    %v1450 = vmax.f32 %v1427, 0.0
    %v1451 = vmax.f32 %v1430, 0.0
    %v1452 = vmax.f32 %v1432, 0.0
    %v1453 = vmax.f32 %v1435, 0.0
    %v1454 = vmax.f32 %v1437, 0.0
    %v1455 = vadd.f32 %v390, %v1439
    %v1456 = vadd.f32 %v391, %v1440
    %v1457 = vadd.f32 %v392, %v1441
    %v1458 = vadd.f32 %v393, %v1442
    %v1459 = vadd.f32 %v394, %v1443
    %v1460 = vadd.f32 %v395, %v1444
    %v1461 = vadd.f32 %v396, %v1445
    %v1462 = vadd.f32 %v397, %v1446
    %v1463 = vadd.f32 %v398, %v1447
    %v1464 = vadd.f32 %v399, %v1448
    %v1465 = vadd.f32 %v400, %v1449
    %v1466 = vadd.f32 %v401, %v1450
    %v1467 = vadd.f32 %v402, %v1451
    %v1468 = vadd.f32 %v403, %v1452
    %v1469 = vadd.f32 %v404, %v1453
    %v1470 = vadd.f32 %v405, %v1454
  $region74: #{formula_net_sat.1} parent=0 // loop_footer
    %s389 = sadd.s32 1, %s385
  $region75: #{formula_net_sat.1} parent=0 // loop_footer_branch
    %384 = sbr.rel target = $region71
  $region76: #{formula_net_sat.1} parent=0 // loop_exit
    _
  %1471 = vst [vmem:[%s17] sm:$0xff] %v390
  %1472 = vst [vmem:[%s17 + $0x8] sm:$0xff] %v391
  %1473 = vst [vmem:[%s17 + $0x10] sm:$0xff] %v392
  %1474 = vst [vmem:[%s17 + $0x18] sm:$0xff] %v393
  %1475 = vst [vmem:[%s17 + $0x20] sm:$0xff] %v394
  %1476 = vst [vmem:[%s17 + $0x28] sm:$0xff] %v395
  %1477 = vst [vmem:[%s17 + $0x30] sm:$0xff] %v396
  %1478 = vst [vmem:[%s17 + $0x38] sm:$0xff] %v397
  %1479 = vst [vmem:[%s17 + $0x40] sm:$0xff] %v398
  %1480 = vst [vmem:[%s17 + $0x48] sm:$0xff] %v399
  %1481 = vst [vmem:[%s17 + $0x50] sm:$0xff] %v400
  %1482 = vst [vmem:[%s17 + $0x58] sm:$0xff] %v401
  %1483 = vst [vmem:[%s17 + $0x60] sm:$0xff] %v402
  %1484 = vst [vmem:[%s17 + $0x68] sm:$0xff] %v403
  %1485 = vst [vmem:[%s17 + $0x70] sm:$0xff] %v404
  %1486 = vst [vmem:[%s17 + $0x78] sm:$0xff] %v405
  // Predicated region
  $region77: #{formula_net_sat.1} parent=0 // pred_check
    _
  $region78: #{formula_net_sat.1} parent=0 // pred_check_branch
    %1488 = sbr.rel (0) target = $region80
  $region79: #{formula_net_sat.1} parent=0 // pred_region
    _
  $region80: #{formula_net_sat.1} parent=0 // pred_fallthru
    _
  // Predicated region
  $region81: #{formula_net_sat.1} parent=0 // pred_check
    _
  $region82: #{formula_net_sat.1} parent=0 // pred_check_branch
    %1490 = sbr.rel (0) target = $region84
  $region83: #{formula_net_sat.1} parent=0 // pred_region
    _
  $region84: #{formula_net_sat.1} parent=0 // pred_fallthru
    _

</llo_original>
